<compile_context>
chip_gen: v5e
topology: v5e:2x2
jax: 0.10.0
libtpu: 0.0.40
codegen_flags: <defaults>
</compile_context>

<pallas_src>
import functools

import jax
import jax.numpy as jnp
from jax.experimental import pallas as pl
from jax.experimental.pallas import tpu as pltpu


def residual_mlp_kernel(x_ref, w1_ref, b1_ref, w2_ref, b2_ref, o_ref):
    """o = GELU(x @ W1 + b1) @ W2 + b2 + x  for one (TILE_M, D) token tile."""
    x = x_ref[...]                                      # (TILE_M, D) f32
    # First matmul: bf16 MXU inputs, f32 accumulation.
    h = jnp.dot(x.astype(jnp.bfloat16), w1_ref[...],
                preferred_element_type=jnp.float32)     # (TILE_M, H) f32
    h = h + b1_ref[...]                                 # broadcast (1, H)
    # tanh GELU: transcendental goes to the EUP slot, nearly free under MXU work.
    # TODO(synk): torch.nn.GELU() default is exact erf; flip approximate=False if
    # bit-closer parity with the PyTorch module is required.
    h = jax.nn.gelu(h, approximate=True)
    # Second matmul: bf16 MXU inputs, f32 accumulation.
    y = jnp.dot(h.astype(jnp.bfloat16), w2_ref[...],
                preferred_element_type=jnp.float32)     # (TILE_M, D) f32
    y = y + b2_ref[...]                                 # broadcast (1, D)
    o_ref[...] = (y + x).astype(o_ref.dtype)            # fused residual add


def prepare_params(w1, b1, w2, b2):
    """One-time parameter prep (outside the per-call jit path).

    Weights go to bf16 (native MXU dtype, half the HBM->VMEM bytes); biases stay
    f32 row vectors so the bias adds and the residual keep full precision.
    """
    return (jnp.asarray(w1, jnp.bfloat16),
            jnp.asarray(b1, jnp.float32).reshape(1, -1),
            jnp.asarray(w2, jnp.bfloat16),
            jnp.asarray(b2, jnp.float32).reshape(1, -1))


def _choose_tile_m(m, max_tile):
    """Largest sublane-aligned (multiple-of-8) divisor of m that is <= max_tile,
    preferring a choice that leaves >= 2 grid steps so v7x's two TensorCores both
    get work.  Returns None if no such divisor exists (caller pads)."""
    divisors = [t for t in range(8, min(m, max_tile) + 1, 8) if m % t == 0]
    if not divisors:
        return None
    multi_step = [t for t in divisors if m // t >= 2]
    return max(multi_step) if multi_step else max(divisors)


@functools.partial(jax.jit, static_argnames=("max_tile_m",))
def residual_add_mlp(x, w1b, b1r, w2b, b2r, *, max_tile_m=512):
    """x: (B, S, D) f32; params from prepare_params.  Returns fn(x) + x."""
    B, S, D = x.shape
    H = w1b.shape[1]
    M = B * S
    x2 = x.reshape(M, D)                       # lane-dense (rows, lanes=D) slab

    tile_m = _choose_tile_m(M, max_tile_m)
    padded = tile_m is None
    if padded:
        # Fallback for awkward M: pad once.  The common case never takes this.
        tile_m = max(8, min(max_tile_m, pl.cdiv(M, 8) * 8))
        m_pad = pl.cdiv(M, tile_m) * tile_m
        x2 = jnp.pad(x2, ((0, m_pad - M), (0, 0)))
    else:
        m_pad = M
    grid_m = m_pad // tile_m

    # VMEM budget: single-buffered bf16 weights + f32 biases, double-buffered
    # token/output tiles, f32 h intermediate (+ bf16 staging headroom).
    vmem_bytes = (2 * D * H * 2                  # bf16 W1 + W2 (Buffered(1))
                  + (H + D) * 4                  # f32 biases
                  + 2 * tile_m * D * 4           # x tile, double-buffered
                  + 2 * tile_m * D * 4           # out tile, double-buffered
                  + 2 * tile_m * H * 4)          # h (f32) + staging headroom
    vmem_limit = int(min(64 << 20, max(2 * vmem_bytes + (4 << 20), 16 << 20)))

    flops = 4 * m_pad * D * H                    # two matmuls: 2 * (2*M*D*H)
    bytes_accessed = (m_pad * D * 4              # x
                      + (D * H + H * D) * 2      # bf16 weights
                      + (H + D) * 4              # biases
                      + m_pad * D * 4)           # out

    # Alias x->out only when x2 is a fresh (padded) buffer; aliasing a live jit
    # parameter would make XLA insert a defensive full-slab copy (a hidden HBM
    # pass).  Callers that can afford to donate x may jit this wrapper with
    # donate_argnums=(0,) and alias unconditionally.
    io_aliases = {0: 0} if padded else {}

    # Constant-index operands: single-buffered, VMEM-resident across grid steps.
    resident = functools.partial(pl.BlockSpec, pipeline_mode=pl.Buffered(1))

    out2 = pl.pallas_call(
        residual_mlp_kernel,
        out_shape=jax.ShapeDtypeStruct((m_pad, D), x.dtype),
        grid=(grid_m,),
        in_specs=[
            pl.BlockSpec((tile_m, D), lambda i: (i, 0)),  # pipelined token tile
            resident((D, H), lambda i: (0, 0)),           # VMEM-resident W1
            resident((1, H), lambda i: (0, 0)),           # b1
            resident((H, D), lambda i: (0, 0)),           # VMEM-resident W2
            resident((1, D), lambda i: (0, 0)),           # b2
        ],
        out_specs=pl.BlockSpec((tile_m, D), lambda i: (i, 0)),
        input_output_aliases=io_aliases,
        compiler_params=pltpu.CompilerParams(
            dimension_semantics=("parallel",),            # rows independent
            vmem_limit_bytes=vmem_limit),
        cost_estimate=pl.CostEstimate(
            flops=flops,
            transcendentals=m_pad * H,                    # tanh in GELU
            bytes_accessed=bytes_accessed),
    )(x2, w1b, b1r, w2b, b2r)

    # TODO(synk): at real ViT widths (D>=768, H>=3072) on v7x (64 MiB VMEM), add
    # an inner "arbitrary" grid axis over H with an f32 (tile_m, D) accumulator
    # scratch so W1/W2 are streamed instead of fully VMEM-resident.

    if padded:
        out2 = out2[:M]
    return out2.reshape(B, S, D)


def reference_kernel_math(x, w1, b1, w2, b2):
    """Mirrors the kernel's math (bf16 MXU inputs, f32 accumulate, tanh GELU)."""
    h = jnp.einsum("bsd,dh->bsh", x.astype(jnp.bfloat16), w1.astype(jnp.bfloat16),
                   preferred_element_type=jnp.float32) + b1
    h = jax.nn.gelu(h, approximate=True)
    y = jnp.einsum("bsh,hd->bsd", h.astype(jnp.bfloat16), w2.astype(jnp.bfloat16),
                   preferred_element_type=jnp.float32) + b2
    return y + x


def reference_f32(x, w1, b1, w2, b2):
    """Pure f32 reference of the PyTorch module semantics (loose sanity check)."""
    h = jax.nn.gelu(x @ w1 + b1, approximate=False)
    return (h @ w2 + b2) + x


if __name__ == "__main__":
    B, S, D = 2, 128, 128          # lane-aligned hidden dim (D % 128 == 0)
    H = 4 * D                      # ViT MLP expansion -> 512

    key = jax.random.PRNGKey(0)
    kx, k1, k2, k3, k4 = jax.random.split(key, 5)
    x = jax.random.normal(kx, (B, S, D), dtype=jnp.float32)
    # Deterministic synthetic parameters (nn.Linear-like scale).
    w1 = jax.random.normal(k1, (D, H), dtype=jnp.float32) * (1.0 / D ** 0.5)
    b1 = jax.random.normal(k3, (H,), dtype=jnp.float32) * 0.1
    w2 = jax.random.normal(k2, (H, D), dtype=jnp.float32) * (1.0 / H ** 0.5)
    b2 = jax.random.normal(k4, (D,), dtype=jnp.float32) * 0.1

    params = prepare_params(w1, b1, w2, b2)   # one-time bf16 cast, outside jit

    out = residual_add_mlp(x, *params)
    out = jax.block_until_ready(out)
    assert out.shape == (B, S, D)

    # Tight check against a reference mirroring the kernel's bf16/tanh math.
    ref_k = reference_kernel_math(x, w1, b1, w2, b2)
    assert jnp.allclose(out, ref_k, atol=1e-2, rtol=1e-2), \
        "mismatch vs kernel-math reference"

    # Loose sanity check against the pure-f32 exact-erf PyTorch-style reference
    # (bf16 MXU inputs + tanh GELU necessarily diverge slightly).
    ref_f = reference_f32(x, w1, b1, w2, b2)
    assert jnp.allclose(out, ref_f, atol=2e-1, rtol=1e-1), \
        "mismatch vs f32 reference"

    print("KERNEL_OK")
</pallas_src>

<mosaic_0001>
module attributes {stable_mosaic.version = 11 : i64} {
  func.func @residual_mlp_kernel(%arg0: i32, %arg1: memref<128x128xf32, #tpu.memory_space<vmem>>, %arg2: memref<128x512xbf16, #tpu.memory_space<vmem>>, %arg3: memref<1x512xf32, #tpu.memory_space<vmem>>, %arg4: memref<512x128xbf16, #tpu.memory_space<vmem>>, %arg5: memref<1x128xf32, #tpu.memory_space<vmem>>, %arg6: memref<128x128xf32, #tpu.memory_space<vmem>>) attributes {dimension_semantics = [#tpu.dimension_semantics<parallel>], iteration_bounds = array<i64: 2>, scalar_prefetch = 0 : i64, scratch_operands = 0 : i64, tpu.core_type = #tpu.core_type<tc>, window_params = [{transform_indices = @transform_0, window_bounds = array<i64: 128, 128>}, {pipeline_mode = #tpu.pipeline_mode<synchronous>, transform_indices = @transform_1, window_bounds = array<i64: 128, 512>}, {pipeline_mode = #tpu.pipeline_mode<synchronous>, transform_indices = @transform_2, window_bounds = array<i64: 1, 512>}, {pipeline_mode = #tpu.pipeline_mode<synchronous>, transform_indices = @transform_3, window_bounds = array<i64: 512, 128>}, {pipeline_mode = #tpu.pipeline_mode<synchronous>, transform_indices = @transform_4, window_bounds = array<i64: 1, 128>}, {transform_indices = @transform_5, window_bounds = array<i64: 128, 128>}]} {
    %c0 = arith.constant 0 : index
    %c0_0 = arith.constant 0 : index
    %0 = vector.load %arg1[%c0, %c0_0] : memref<128x128xf32, #tpu.memory_space<vmem>>, vector<128x128xf32>
    %1 = arith.truncf %0 : vector<128x128xf32> to vector<128x128xbf16>
    %c0_1 = arith.constant 0 : index
    %c0_2 = arith.constant 0 : index
    %2 = vector.load %arg2[%c0_1, %c0_2] : memref<128x512xbf16, #tpu.memory_space<vmem>>, vector<128x512xbf16>
    %cst = arith.constant dense<0.000000e+00> : vector<128x512xf32>
    %3 = tpu.matmul %1, %2, %cst {dimension_numbers = #tpu.dot_dimension_numbers<[1], [0], [0], [1], [0, 0, 1, 1], [], []>} : vector<128x128xbf16>, vector<128x512xbf16>, vector<128x512xf32> -> vector<128x512xf32>
    %c0_3 = arith.constant 0 : index
    %c0_4 = arith.constant 0 : index
    %4 = vector.load %arg3[%c0_3, %c0_4] : memref<1x512xf32, #tpu.memory_space<vmem>>, vector<1x512xf32>
    %5 = vector.broadcast %4 : vector<1x512xf32> to vector<128x512xf32>
    %6 = arith.addf %3, %5 : vector<128x512xf32>
    %7 = arith.mulf %6, %6 : vector<128x512xf32>
    %8 = arith.mulf %6, %7 : vector<128x512xf32>
    %cst_5 = arith.constant 4.471500e-02 : f32
    %9 = vector.broadcast %cst_5 : f32 to vector<128x512xf32>
    %10 = arith.mulf %9, %8 : vector<128x512xf32>
    %11 = arith.addf %6, %10 : vector<128x512xf32>
    %cst_6 = arith.constant 0.797884583 : f32
    %12 = vector.broadcast %cst_6 : f32 to vector<128x512xf32>
    %13 = arith.mulf %12, %11 : vector<128x512xf32>
    %14 = math.tanh %13 : vector<128x512xf32>
    %cst_7 = arith.constant 1.000000e+00 : f32
    %15 = vector.broadcast %cst_7 : f32 to vector<128x512xf32>
    %16 = arith.addf %15, %14 : vector<128x512xf32>
    %cst_8 = arith.constant 5.000000e-01 : f32
    %17 = vector.broadcast %cst_8 : f32 to vector<128x512xf32>
    %18 = arith.mulf %17, %16 : vector<128x512xf32>
    %19 = arith.mulf %6, %18 : vector<128x512xf32>
    %20 = arith.truncf %19 : vector<128x512xf32> to vector<128x512xbf16>
    %c0_9 = arith.constant 0 : index
    %c0_10 = arith.constant 0 : index
    %21 = vector.load %arg4[%c0_9, %c0_10] : memref<512x128xbf16, #tpu.memory_space<vmem>>, vector<512x128xbf16>
    %cst_11 = arith.constant dense<0.000000e+00> : vector<128x128xf32>
    %22 = tpu.matmul %20, %21, %cst_11 {dimension_numbers = #tpu.dot_dimension_numbers<[1], [0], [0], [1], [0, 0, 1, 1], [], []>} : vector<128x512xbf16>, vector<512x128xbf16>, vector<128x128xf32> -> vector<128x128xf32>
    %c0_12 = arith.constant 0 : index
    %c0_13 = arith.constant 0 : index
    %23 = vector.load %arg5[%c0_12, %c0_13] : memref<1x128xf32, #tpu.memory_space<vmem>>, vector<1x128xf32>
    %24 = vector.broadcast %23 : vector<1x128xf32> to vector<128x128xf32>
    %25 = arith.addf %22, %24 : vector<128x128xf32>
    %26 = arith.addf %25, %0 : vector<128x128xf32>
    %c0_14 = arith.constant 0 : index
    %c0_15 = arith.constant 0 : index
    %27 = vector.load %arg6[%c0_14, %c0_15] : memref<128x128xf32, #tpu.memory_space<vmem>>, vector<128x128xf32>
    tpu.vector_store %arg6[%c0_14, %c0_15], %26 {strides = array<i32>} : memref<128x128xf32, #tpu.memory_space<vmem>>, vector<128x128xf32>,
    return
  }
  func.func @transform_0(%arg0: i32) -> (i32, i32) {
    %c0_i32 = arith.constant 0 : i32
    %c0_i32_0 = arith.constant 0 : i32
    return %arg0, %c0_i32 : i32, i32
  }
  func.func @transform_1(%arg0: i32) -> (i32, i32) {
    %c0_i32 = arith.constant 0 : i32
    %c0_i32_0 = arith.constant 0 : i32
    %c0_i32_1 = arith.constant 0 : i32
    return %c0_i32, %c0_i32_0 : i32, i32
  }
  func.func @transform_2(%arg0: i32) -> (i32, i32) {
    %c0_i32 = arith.constant 0 : i32
    %c0_i32_0 = arith.constant 0 : i32
    %c0_i32_1 = arith.constant 0 : i32
    return %c0_i32, %c0_i32_0 : i32, i32
  }
  func.func @transform_3(%arg0: i32) -> (i32, i32) {
    %c0_i32 = arith.constant 0 : i32
    %c0_i32_0 = arith.constant 0 : i32
    %c0_i32_1 = arith.constant 0 : i32
    return %c0_i32, %c0_i32_0 : i32, i32
  }
  func.func @transform_4(%arg0: i32) -> (i32, i32) {
    %c0_i32 = arith.constant 0 : i32
    %c0_i32_0 = arith.constant 0 : i32
    %c0_i32_1 = arith.constant 0 : i32
    return %c0_i32, %c0_i32_0 : i32, i32
  }
  func.func @transform_5(%arg0: i32) -> (i32, i32) {
    %c0_i32 = arith.constant 0 : i32
    %c0_i32_0 = arith.constant 0 : i32
    return %arg0, %c0_i32 : i32, i32
  }
}

</mosaic_0001>

<llo_original>
// kernel: residual_add_mlp.1
$region0: #{residual_add_mlp.1}
  #allocation0 [shape = 'u32[]', space=smem, size = 0x4, offset = 0x4, fixed_abs, tag = 'smem constant byte address 0x4 - core index']
  #allocation1 [shape = 'u32[72,128]{1,0:T(1,128)}', space=vmem, size = 0x9000, scoped, tag = 'internal scratch']
  %s0 = inlined_call_operand.hbm [shape: f32[256,128], index: 0, kind: input, shape index: {}]
  %s1 = inlined_call_operand.hbm [shape: bf16[128,512], index: 1, kind: input, shape index: {}]
  %s2 = inlined_call_operand.hbm [shape: f32[1,512], index: 2, kind: input, shape index: {}]
  %s3 = inlined_call_operand.hbm [shape: bf16[512,128], index: 3, kind: input, shape index: {}]
  %s4 = inlined_call_operand.vmem [shape: f32[1,128], index: 4, kind: input, shape index: {}]
  %s5 = inlined_call_operand.hbm [shape: f32[256,128], index: 5, kind: output, shape index: {}]
  %s6 = sld [smem:[#allocation0]]
  $region69: #{residual_add_mlp.1} parent=0
    _
  %s8 = ssub.s32 1, %s6
  %s9 = scalar_select 0, %s8, %s6
  $region1: #{residual_add_mlp.1} parent=0
    #allocation2 [shape = 'u8[131072]{0}', space=vmem, size = 0x20000, scoped, tag = 'input window, operand 0']
    #allocation3 [shape = 's32[2]{0}', space=sflag, size = 0x8, scoped, tag = 'scoped memory for residual_add_mlp.1']
    #allocation4 [shape = 's32[2]{0}', space=sflag, size = 0x8, scoped, tag = 'scoped memory for residual_add_mlp.1']
    #allocation5 [shape = 'u8[131072]{0}', space=vmem, size = 0x20000, scoped, tag = 'input window, operand 1, single buffered']
    #allocation6 [shape = 's32[1]{0}', space=sflag, size = 0x4, scoped, tag = 'scoped memory for residual_add_mlp.1']
    #allocation7 [shape = 'u8[2048]{0}', space=vmem, size = 0x800, scoped, tag = 'input window, operand 2, single buffered']
    #allocation8 [shape = 'u8[131072]{0}', space=vmem, size = 0x20000, scoped, tag = 'input window, operand 3, single buffered']
    #allocation9 [shape = 's32[1]{0}', space=sflag, size = 0x4, scoped, tag = 'scoped memory for residual_add_mlp.1']
    #allocation10 [shape = 'u8[131072]{0}', space=vmem, size = 0x20000, scoped, tag = 'output window, operand 0']
    %10 = vsyncpa [#allocation3], 0
    %s11 = scalar_lea.sflag [#allocation3], 1
    %12 = vsyncpa %s11, 0
    %13 = vsyncpa [#allocation6], 0
    %14 = vsyncpa [#allocation9], 0
    %15 = vsyncpa [#allocation4], 0
    %s16 = scalar_lea.sflag [#allocation4], 1
    %17 = vsyncpa %s16, 0
    loop: start=0, step=1, limit=4
    $region2: #{residual_add_mlp.1} parent=1 // loop_pre_header
      _
    $region3: #{residual_add_mlp.1} parent=1 // loop_header
      %s19 = sphi 0, %s23
      %p20 = scmp.ge.s32.totalorder %s19, 4
      %s29 = sphi 0, %s31
      %s32 = sphi 0, %s29
      %s33 = sphi 0, %s32
      %s49 = sphi 0, %s33
      %s53 = sphi 0, %s53
      %s55 = sphi 0, %s53
      %s56 = sphi 0, %s55
      %s70 = sphi 0, %s56
      %s74 = sphi 0, %s74
      %s76 = sphi 0, %s74
      %s77 = sphi 0, %s76
      %s91 = sphi 0, %s77
      %s95 = sphi 0, %s95
      %s97 = sphi 0, %s95
      %s98 = sphi 0, %s97
      %s112 = sphi 0, %s98
      %s116 = sphi 0, %s116
      %s118 = sphi 0, %s116
      %s119 = sphi 0, %s118
      %s133 = sphi 0, %s119
      %s139 = sphi 0, %s141
      %s142 = sphi 0, %s139
      %s143 = sphi 0, %s142
      %s159 = sphi 0, %s143
    $region4: #{residual_add_mlp.1} parent=1 // loop_header_branch
      %22 = sbr.rel (%p20) target = $region8
    $region5: #{residual_add_mlp.1} parent=1 // loop_body
      %s24 = ssub.s32 %s19, 1
      %s25 = ssub.s32 %s19, 2
      %s26 = sadd.s32 %s19, 1
      %s27 = ssub.s32 %s19, %s26
      %p28 = scmp.eq.s32.totalorder %s27, 0
      %s30 = sadd.s32 %s29, 1
      %s31 = scalar_select %p28, %s29, %s30
      %p34 = pneg %p28
      %p35 = scmp.eq.s32.totalorder %s19, 1
      %p36 = por %p34, %p35
      %p37 = scmp.ne.s32.totalorder %s29, %s32
      %p38 = scmp.eq.s32.totalorder %s19, 0
      %p39 = por %p37, %p38
      %p40 = scmp.ne.s32.totalorder %s29, %s32
      %p41 = scmp.eq.s32.totalorder %s24, 1
      %p42 = por %p40, %p41
      %p43 = scmp.ne.s32.totalorder %s32, %s33
      %p44 = scmp.eq.s32.totalorder %s24, 0
      %p45 = por %p43, %p44
      %p46 = scmp.ne.s32.totalorder %s32, %s33
      %p47 = scmp.eq.s32.totalorder %s25, 1
      %p48 = por %p46, %p47
      %p50 = scmp.ne.s32.totalorder %s33, %s49
      %p51 = scmp.eq.s32.totalorder %s25, 0
      %p52 = por %p50, %p51
      %s54 = sadd.s32 %s53, 1
      %p57 = scmp.eq.s32.totalorder %s19, 1
      %p58 = scmp.ne.s32.totalorder %s53, %s55
      %p59 = scmp.eq.s32.totalorder %s19, 0
      %p60 = por %p58, %p59
      %p61 = scmp.ne.s32.totalorder %s53, %s55
      %p62 = scmp.eq.s32.totalorder %s24, 1
      %p63 = por %p61, %p62
      %p64 = scmp.ne.s32.totalorder %s55, %s56
      %p65 = scmp.eq.s32.totalorder %s24, 0
      %p66 = por %p64, %p65
      %p67 = scmp.ne.s32.totalorder %s55, %s56
      %p68 = scmp.eq.s32.totalorder %s25, 1
      %p69 = por %p67, %p68
      %p71 = scmp.ne.s32.totalorder %s56, %s70
      %p72 = scmp.eq.s32.totalorder %s25, 0
      %p73 = por %p71, %p72
      %s75 = sadd.s32 %s74, 1
      %p78 = scmp.eq.s32.totalorder %s19, 1
      %p79 = scmp.ne.s32.totalorder %s74, %s76
      %p80 = scmp.eq.s32.totalorder %s19, 0
      %p81 = por %p79, %p80
      %p82 = scmp.ne.s32.totalorder %s74, %s76
      %p83 = scmp.eq.s32.totalorder %s24, 1
      %p84 = por %p82, %p83
      %p85 = scmp.ne.s32.totalorder %s76, %s77
      %p86 = scmp.eq.s32.totalorder %s24, 0
      %p87 = por %p85, %p86
      %p88 = scmp.ne.s32.totalorder %s76, %s77
      %p89 = scmp.eq.s32.totalorder %s25, 1
      %p90 = por %p88, %p89
      %p92 = scmp.ne.s32.totalorder %s77, %s91
      %p93 = scmp.eq.s32.totalorder %s25, 0
      %p94 = por %p92, %p93
      %s96 = sadd.s32 %s95, 1
      %p99 = scmp.eq.s32.totalorder %s19, 1
      %p100 = scmp.ne.s32.totalorder %s95, %s97
      %p101 = scmp.eq.s32.totalorder %s19, 0
      %p102 = por %p100, %p101
      %p103 = scmp.ne.s32.totalorder %s95, %s97
      %p104 = scmp.eq.s32.totalorder %s24, 1
      %p105 = por %p103, %p104
      %p106 = scmp.ne.s32.totalorder %s97, %s98
      %p107 = scmp.eq.s32.totalorder %s24, 0
      %p108 = por %p106, %p107
      %p109 = scmp.ne.s32.totalorder %s97, %s98
      %p110 = scmp.eq.s32.totalorder %s25, 1
      %p111 = por %p109, %p110
      %p113 = scmp.ne.s32.totalorder %s98, %s112
      %p114 = scmp.eq.s32.totalorder %s25, 0
      %p115 = por %p113, %p114
      %s117 = sadd.s32 %s116, 1
      %p120 = scmp.eq.s32.totalorder %s19, 1
      %p121 = scmp.ne.s32.totalorder %s116, %s118
      %p122 = scmp.eq.s32.totalorder %s19, 0
      %p123 = por %p121, %p122
      %p124 = scmp.ne.s32.totalorder %s116, %s118
      %p125 = scmp.eq.s32.totalorder %s24, 1
      %p126 = por %p124, %p125
      %p127 = scmp.ne.s32.totalorder %s118, %s119
      %p128 = scmp.eq.s32.totalorder %s24, 0
      %p129 = por %p127, %p128
      %p130 = scmp.ne.s32.totalorder %s118, %s119
      %p131 = scmp.eq.s32.totalorder %s25, 1
      %p132 = por %p130, %p131
      %p134 = scmp.ne.s32.totalorder %s119, %s133
      %p135 = scmp.eq.s32.totalorder %s25, 0
      %p136 = por %p134, %p135
      %s137 = ssub.s32 %s19, %s26
      %p138 = scmp.eq.s32.totalorder %s137, 0
      %s140 = sadd.s32 %s139, 1
      %s141 = scalar_select %p138, %s139, %s140
      %p144 = pneg %p138
      %p145 = scmp.eq.s32.totalorder %s19, 1
      %p146 = por %p144, %p145
      %p147 = scmp.ne.s32.totalorder %s139, %s142
      %p148 = scmp.eq.s32.totalorder %s19, 0
      %p149 = por %p147, %p148
      %p150 = scmp.ne.s32.totalorder %s139, %s142
      %p151 = scmp.eq.s32.totalorder %s24, 1
      %p152 = por %p150, %p151
      %p153 = scmp.ne.s32.totalorder %s142, %s143
      %p154 = scmp.eq.s32.totalorder %s24, 0
      %p155 = por %p153, %p154
      %p156 = scmp.ne.s32.totalorder %s142, %s143
      %p157 = scmp.eq.s32.totalorder %s25, 1
      %p158 = por %p156, %p157
      %p160 = scmp.ne.s32.totalorder %s143, %s159
      %p161 = scmp.eq.s32.totalorder %s25, 0
      %p162 = por %p160, %p161
      %p163 = scmp.le.s32.totalorder 1, %s19
      %p164 = scmp.lt.s32.totalorder %s19, 3
      %p165 = pnand %p163, %p164
      %p166 = pneg %p165
      // Predicated region
      $region9: #{residual_add_mlp.1} parent=5 // pred_check
        _
      $region10: #{residual_add_mlp.1} parent=5 // pred_check_branch
        %168 = sbr.rel (%p165) target = $region12
      $region11: #{residual_add_mlp.1} parent=5 // pred_region
        %s169 = ssub.s32 %s19, 1
        // Predicated region
        $region13: #{residual_add_mlp.1} parent=11 // pred_check
          %p170 = pneg %p66
        $region14: #{residual_add_mlp.1} parent=11 // pred_check_branch
          %172 = sbr.rel (%p170) target = $region16
        $region15: #{residual_add_mlp.1} parent=11 // pred_region
          %174 = vsyncadd [#allocation6], 0
          %s175 = sshll.u32 %s1, 4
          %s176 = int_to_ptr.hbm [resolvable:$true] %s175
          %s177 = sshll.u32 [#allocation5], 4
          %s178 = int_to_ptr.vmem [resolvable:$true] %s177
          %183 = dma.hbm_to_vmem [thread:$0]  %s176, 4096, %s178, [#allocation6], 256, 256, 16
        $region16: #{residual_add_mlp.1} parent=11 // pred_fallthru
          _
        // Predicated region
        $region17: #{residual_add_mlp.1} parent=11 // pred_check
          %p184 = pneg %p87
        $region18: #{residual_add_mlp.1} parent=11 // pred_check_branch
          %186 = sbr.rel (%p184) target = $region20
        $region19: #{residual_add_mlp.1} parent=11 // pred_region
          %188 = vsyncadd [#allocation6], 0
          %s190 = sshll.u32 %s2, 4
          %s191 = int_to_ptr.hbm [resolvable:$true] %s190
          %s192 = sshll.u32 [#allocation7], 4
          %s193 = int_to_ptr.vmem [resolvable:$true] %s192
          %195 = dma.hbm_to_vmem [thread:$0]  %s191, 64, %s193, [#allocation6]
        $region20: #{residual_add_mlp.1} parent=11 // pred_fallthru
          _
        // Predicated region
        $region21: #{residual_add_mlp.1} parent=11 // pred_check
          %p196 = pneg %p108
        $region22: #{residual_add_mlp.1} parent=11 // pred_check_branch
          %198 = sbr.rel (%p196) target = $region24
        $region23: #{residual_add_mlp.1} parent=11 // pred_region
          %200 = vsyncadd [#allocation9], 0
          %s201 = sshll.u32 %s3, 4
          %s202 = int_to_ptr.hbm [resolvable:$true] %s201
          %s203 = sshll.u32 [#allocation8], 4
          %s204 = int_to_ptr.vmem [resolvable:$true] %s203
          %209 = dma.hbm_to_vmem [thread:$0]  %s202, 4096, %s204, [#allocation9], 64, 64, 4
        $region24: #{residual_add_mlp.1} parent=11 // pred_fallthru
          _
        // Predicated region
        $region25: #{residual_add_mlp.1} parent=11 // pred_check
          %p210 = pneg %p129
        $region26: #{residual_add_mlp.1} parent=11 // pred_check_branch
          %212 = sbr.rel (%p210) target = $region28
        $region27: #{residual_add_mlp.1} parent=11 // pred_region
          _
        $region28: #{residual_add_mlp.1} parent=11 // pred_fallthru
          _
      $region12: #{residual_add_mlp.1} parent=5 // pred_fallthru
        _
      %p213 = scmp.lt.s32.totalorder %s19, 2
      // Predicated region
      $region29: #{residual_add_mlp.1} parent=5 // pred_check
        %p214 = pneg %p213
      $region30: #{residual_add_mlp.1} parent=5 // pred_check_branch
        %216 = sbr.rel (%p214) target = $region32
      $region31: #{residual_add_mlp.1} parent=5 // pred_region
        // Predicated region
        $region33: #{residual_add_mlp.1} parent=31 // pred_check
          %p217 = pneg %p39
        $region34: #{residual_add_mlp.1} parent=31 // pred_check_branch
          %219 = sbr.rel (%p217) target = $region36
        $region35: #{residual_add_mlp.1} parent=31 // pred_region
          %s220 = sand.u32 %s29, 1
          %s221 = scalar_lea.sflag [#allocation3], %s220
          %s222 = sand.u32 %s29, 1
          %s223 = smul.addr %s222, 128
          %s224 = scalar_lea.vmem [#allocation2], %s223
          %s225 = smul.u32 16, %s19
          %227 = vsyncadd %s221, 0
          %s228 = smul.addr %s225, 8
          %s229 = scalar_lea.hbm %s0, %s228
          %s230 = sshll.u32 %s229, 4
          %s231 = int_to_ptr.hbm [resolvable:$true] %s230
          %s232 = sshll.u32 %s224, 4
          %s233 = int_to_ptr.vmem [resolvable:$true] %s232
          %238 = dma.hbm_to_vmem [thread:$0]  %s231, 2048, %s233, %s221, 128, 128, 8
        $region36: #{residual_add_mlp.1} parent=31 // pred_fallthru
          _
      $region32: #{residual_add_mlp.1} parent=5 // pred_fallthru
        _
      %p239 = scmp.le.s32.totalorder 1, %s19
      %p240 = scmp.lt.s32.totalorder %s19, 3
      %p241 = pnand %p239, %p240
      %p242 = pneg %p241
      // Predicated region
      $region37: #{residual_add_mlp.1} parent=5 // pred_check
        _
      $region38: #{residual_add_mlp.1} parent=5 // pred_check_branch
        %244 = sbr.rel (%p241) target = $region40
      $region39: #{residual_add_mlp.1} parent=5 // pred_region
        %s245 = ssub.s32 %s19, 1
        %s246 = sand.u32 %s32, 1
        %s247 = scalar_lea.sflag [#allocation3], %s246
        %s248 = sand.u32 %s32, 1
        %s249 = smul.addr %s248, 128
        %s250 = scalar_lea.vmem [#allocation2], %s249
        // Predicated region
        $region41: #{residual_add_mlp.1} parent=39 // pred_check
          %p251 = pneg %p45
        $region42: #{residual_add_mlp.1} parent=39 // pred_check_branch
          %253 = sbr.rel (%p251) target = $region44
        $region43: #{residual_add_mlp.1} parent=39 // pred_region
          %255 = dma.done %s247, 2048
        $region44: #{residual_add_mlp.1} parent=39 // pred_fallthru
          _
        // Predicated region
        $region45: #{residual_add_mlp.1} parent=39 // pred_check
          %p256 = pneg %p66
        $region46: #{residual_add_mlp.1} parent=39 // pred_check_branch
          %258 = sbr.rel (%p256) target = $region48
        $region47: #{residual_add_mlp.1} parent=39 // pred_region
          %260 = dma.done [#allocation6], 4096
        $region48: #{residual_add_mlp.1} parent=39 // pred_fallthru
          _
        // Predicated region
        $region49: #{residual_add_mlp.1} parent=39 // pred_check
          %p261 = pneg %p87
        $region50: #{residual_add_mlp.1} parent=39 // pred_check_branch
          %263 = sbr.rel (%p261) target = $region52
        $region51: #{residual_add_mlp.1} parent=39 // pred_region
          %265 = dma.done [#allocation6], 64
        $region52: #{residual_add_mlp.1} parent=39 // pred_fallthru
          _
        // Predicated region
        $region53: #{residual_add_mlp.1} parent=39 // pred_check
          %p266 = pneg %p108
        $region54: #{residual_add_mlp.1} parent=39 // pred_check_branch
          %268 = sbr.rel (%p266) target = $region56
        $region55: #{residual_add_mlp.1} parent=39 // pred_region
          %270 = dma.done [#allocation9], 4096
        $region56: #{residual_add_mlp.1} parent=39 // pred_fallthru
          _
        %s271 = sand.u32 %s32, 1
        %s272 = scalar_lea.sflag [#allocation3], %s271
        %s273 = sand.u32 %s32, 1
        %s274 = smul.addr %s273, 128
        %s275 = scalar_lea.vmem [#allocation2], %s274
        %p276 = pneg %p45
        %p277 = pneg %p42
        %p278 = pneg %p66
        %p279 = pneg %p63
        %p280 = pneg %p87
        %p281 = pneg %p84
        %p282 = pneg %p108
        %p283 = pneg %p105
        %p284 = pneg %p129
        %p285 = pneg %p126
        %p286 = pneg %p155
        %p287 = pneg %p152
        %s288 = sand.u32 %s142, 1
        %s289 = scalar_lea.sflag [#allocation4], %s288
        %s290 = sand.u32 %s142, 1
        %s291 = smul.addr %s290, 128
        %s292 = scalar_lea.vmem [#allocation10], %s291
        %s293 = smul.u32 16, %s24
        %s294 = smul.u32 16, %s24
        %v295 = vld [vmem:[%s250] sm:$0xff]
        %v296 = vld [vmem:[%s250 + $0x8] sm:$0xff]
        %v297 = vld [vmem:[%s250 + $0x10] sm:$0xff]
        %v298 = vld [vmem:[%s250 + $0x18] sm:$0xff]
        %v299 = vld [vmem:[%s250 + $0x20] sm:$0xff]
        %v300 = vld [vmem:[%s250 + $0x28] sm:$0xff]
        %v301 = vld [vmem:[%s250 + $0x30] sm:$0xff]
        %v302 = vld [vmem:[%s250 + $0x38] sm:$0xff]
        %v303 = vld [vmem:[%s250 + $0x40] sm:$0xff]
        %v304 = vld [vmem:[%s250 + $0x48] sm:$0xff]
        %v305 = vld [vmem:[%s250 + $0x50] sm:$0xff]
        %v306 = vld [vmem:[%s250 + $0x58] sm:$0xff]
        %v307 = vld [vmem:[%s250 + $0x60] sm:$0xff]
        %v308 = vld [vmem:[%s250 + $0x68] sm:$0xff]
        %v309 = vld [vmem:[%s250 + $0x70] sm:$0xff]
        %v310 = vld [vmem:[%s250 + $0x78] sm:$0xff]
        %v311 = vpack.c.bf16 %v296, %v295
        %v312 = vpack.c.bf16 %v298, %v297
        %v313 = vpack.c.bf16 %v300, %v299
        %v314 = vpack.c.bf16 %v302, %v301
        %v315 = vpack.c.bf16 %v304, %v303
        %v316 = vpack.c.bf16 %v306, %v305
        %v317 = vpack.c.bf16 %v308, %v307
        %v318 = vpack.c.bf16 %v310, %v309
        %v319 = vld [vmem:[#allocation5] sm:$0xff]
        %v320 = vld [vmem:[#allocation5 + $0x8] sm:$0xff]
        %v321 = vld [vmem:[#allocation5 + $0x10] sm:$0xff]
        %v322 = vld [vmem:[#allocation5 + $0x18] sm:$0xff]
        %v323 = vld [vmem:[#allocation5 + $0x20] sm:$0xff]
        %v324 = vld [vmem:[#allocation5 + $0x28] sm:$0xff]
        %v325 = vld [vmem:[#allocation5 + $0x30] sm:$0xff]
        %v326 = vld [vmem:[#allocation5 + $0x38] sm:$0xff]
        %v327 = vld [vmem:[#allocation5 + $0x40] sm:$0xff]
        %v328 = vld [vmem:[#allocation5 + $0x48] sm:$0xff]
        %v329 = vld [vmem:[#allocation5 + $0x50] sm:$0xff]
        %v330 = vld [vmem:[#allocation5 + $0x58] sm:$0xff]
        %v331 = vld [vmem:[#allocation5 + $0x60] sm:$0xff]
        %v332 = vld [vmem:[#allocation5 + $0x68] sm:$0xff]
        %v333 = vld [vmem:[#allocation5 + $0x70] sm:$0xff]
        %v334 = vld [vmem:[#allocation5 + $0x78] sm:$0xff]
        %v335 = vld [vmem:[#allocation5 + $0x80] sm:$0xff]
        %v336 = vld [vmem:[#allocation5 + $0x88] sm:$0xff]
        %v337 = vld [vmem:[#allocation5 + $0x90] sm:$0xff]
        %v338 = vld [vmem:[#allocation5 + $0x98] sm:$0xff]
        %v339 = vld [vmem:[#allocation5 + $0xa0] sm:$0xff]
        %v340 = vld [vmem:[#allocation5 + $0xa8] sm:$0xff]
        %v341 = vld [vmem:[#allocation5 + $0xb0] sm:$0xff]
        %v342 = vld [vmem:[#allocation5 + $0xb8] sm:$0xff]
        %v343 = vld [vmem:[#allocation5 + $0xc0] sm:$0xff]
        %v344 = vld [vmem:[#allocation5 + $0xc8] sm:$0xff]
        %v345 = vld [vmem:[#allocation5 + $0xd0] sm:$0xff]
        %v346 = vld [vmem:[#allocation5 + $0xd8] sm:$0xff]
        %v347 = vld [vmem:[#allocation5 + $0xe0] sm:$0xff]
        %v348 = vld [vmem:[#allocation5 + $0xe8] sm:$0xff]
        %v349 = vld [vmem:[#allocation5 + $0xf0] sm:$0xff]
        %v350 = vld [vmem:[#allocation5 + $0xf8] sm:$0xff]
        %v351 = vld [vmem:[#allocation7] sm:$0xf]
        %v353 = vperm.slane %v351, 0
        %v354 = vperm.slane %v351, 1
        %v355 = vperm.slane %v351, 2
        %v356 = vperm.slane %v351, 3
        %v393 = vunpack.c.l.b16 %v319
        %v394 = vunpack.c.h.b16 %v319
        %v395 = vunpack.c.l.b16 %v320
        %v396 = vunpack.c.h.b16 %v320
        %v397 = vunpack.c.l.b16 %v321
        %v398 = vunpack.c.h.b16 %v321
        %v399 = vunpack.c.l.b16 %v322
        %v400 = vunpack.c.h.b16 %v322
        %v401 = vunpack.c.l.b16 %v323
        %v402 = vunpack.c.h.b16 %v323
        %v403 = vunpack.c.l.b16 %v324
        %v404 = vunpack.c.h.b16 %v324
        %v405 = vunpack.c.l.b16 %v325
        %v406 = vunpack.c.h.b16 %v325
        %v407 = vunpack.c.l.b16 %v326
        %v408 = vunpack.c.h.b16 %v326
        %v409 = vunpack.c.l.b16 %v327
        %v410 = vunpack.c.h.b16 %v327
        %v411 = vunpack.c.l.b16 %v328
        %v412 = vunpack.c.h.b16 %v328
        %v413 = vunpack.c.l.b16 %v329
        %v414 = vunpack.c.h.b16 %v329
        %v415 = vunpack.c.l.b16 %v330
        %v416 = vunpack.c.h.b16 %v330
        %v417 = vunpack.c.l.b16 %v331
        %v418 = vunpack.c.h.b16 %v331
        %v419 = vunpack.c.l.b16 %v332
        %v420 = vunpack.c.h.b16 %v332
        %v421 = vunpack.c.l.b16 %v333
        %v422 = vunpack.c.h.b16 %v333
        %v423 = vunpack.c.l.b16 %v334
        %v424 = vunpack.c.h.b16 %v334
        %v425 = vunpack.c.l.b16 %v335
        %v426 = vunpack.c.h.b16 %v335
        %v427 = vunpack.c.l.b16 %v336
        %v428 = vunpack.c.h.b16 %v336
        %v429 = vunpack.c.l.b16 %v337
        %v430 = vunpack.c.h.b16 %v337
        %v431 = vunpack.c.l.b16 %v338
        %v432 = vunpack.c.h.b16 %v338
        %v433 = vunpack.c.l.b16 %v339
        %v434 = vunpack.c.h.b16 %v339
        %v435 = vunpack.c.l.b16 %v340
        %v436 = vunpack.c.h.b16 %v340
        %v437 = vunpack.c.l.b16 %v341
        %v438 = vunpack.c.h.b16 %v341
        %v439 = vunpack.c.l.b16 %v342
        %v440 = vunpack.c.h.b16 %v342
        %v441 = vunpack.c.l.b16 %v343
        %v442 = vunpack.c.h.b16 %v343
        %v443 = vunpack.c.l.b16 %v344
        %v444 = vunpack.c.h.b16 %v344
        %v445 = vunpack.c.l.b16 %v345
        %v446 = vunpack.c.h.b16 %v345
        %v447 = vunpack.c.l.b16 %v346
        %v448 = vunpack.c.h.b16 %v346
        %v449 = vunpack.c.l.b16 %v347
        %v450 = vunpack.c.h.b16 %v347
        %v451 = vunpack.c.l.b16 %v348
        %v452 = vunpack.c.h.b16 %v348
        %v453 = vunpack.c.l.b16 %v349
        %v454 = vunpack.c.h.b16 %v349
        %v455 = vunpack.c.l.b16 %v350
        %v456 = vunpack.c.h.b16 %v350
        %v457 = vpack.c.b16 %v397, %v393
        %v458 = vpack.c.b16 %v398, %v394
        %v459 = vpack.c.b16 %v399, %v395
        %v460 = vpack.c.b16 %v400, %v396
        %v461 = vpack.c.b16 %v405, %v401
        %v462 = vpack.c.b16 %v406, %v402
        %v463 = vpack.c.b16 %v407, %v403
        %v464 = vpack.c.b16 %v408, %v404
        %v465 = vpack.c.b16 %v413, %v409
        %v466 = vpack.c.b16 %v414, %v410
        %v467 = vpack.c.b16 %v415, %v411
        %v468 = vpack.c.b16 %v416, %v412
        %v469 = vpack.c.b16 %v421, %v417
        %v470 = vpack.c.b16 %v422, %v418
        %v471 = vpack.c.b16 %v423, %v419
        %v472 = vpack.c.b16 %v424, %v420
        %v473 = vpack.c.b16 %v429, %v425
        %v474 = vpack.c.b16 %v430, %v426
        %v475 = vpack.c.b16 %v431, %v427
        %v476 = vpack.c.b16 %v432, %v428
        %v477 = vpack.c.b16 %v437, %v433
        %v478 = vpack.c.b16 %v438, %v434
        %v479 = vpack.c.b16 %v439, %v435
        %v480 = vpack.c.b16 %v440, %v436
        %v481 = vpack.c.b16 %v445, %v441
        %v482 = vpack.c.b16 %v446, %v442
        %v483 = vpack.c.b16 %v447, %v443
        %v484 = vpack.c.b16 %v448, %v444
        %v485 = vpack.c.b16 %v453, %v449
        %v486 = vpack.c.b16 %v454, %v450
        %v487 = vpack.c.b16 %v455, %v451
        %v488 = vpack.c.b16 %v456, %v452
        %521 = vmatpush.bf16.msra.mxu0 %v485
        %522 = vmatpush.bf16.msra.mxu0 %v481
        %523 = vmatpush.bf16.msra.mxu0 %v477
        %524 = vmatpush.bf16.msra.mxu0 %v473
        %525 = vmatpush.bf16.msra.mxu0 %v469
        %526 = vmatpush.bf16.msra.mxu0 %v465
        %527 = vmatpush.bf16.msra.mxu0 %v461
        %528 = vmatpush.bf16.msra.mxu0 %v457
        %529 = vmatmul.bf16.gmra.mxu0 %v311
        %v530 = vpop.f32.mrf.mxu0
        %v531 = vadd.f32 %v353, %v530
        %v532 = vpop.f32.mrf.mxu0
        %v533 = vadd.f32 %v353, %v532
        %534 = vmatmul.bf16.gmra.mxu0 %v312
        %v535 = vpop.f32.mrf.mxu0
        %v536 = vadd.f32 %v353, %v535
        %v537 = vpop.f32.mrf.mxu0
        %v538 = vadd.f32 %v353, %v537
        %539 = vmatmul.bf16.gmra.mxu0 %v313
        %v540 = vpop.f32.mrf.mxu0
        %v541 = vadd.f32 %v353, %v540
        %v542 = vpop.f32.mrf.mxu0
        %v543 = vadd.f32 %v353, %v542
        %544 = vmatmul.bf16.gmra.mxu0 %v314
        %v545 = vpop.f32.mrf.mxu0
        %v546 = vadd.f32 %v353, %v545
        %v547 = vpop.f32.mrf.mxu0
        %v548 = vadd.f32 %v353, %v547
        %549 = vmatmul.bf16.gmra.mxu0 %v315
        %v550 = vpop.f32.mrf.mxu0
        %v551 = vadd.f32 %v353, %v550
        %v552 = vpop.f32.mrf.mxu0
        %v553 = vadd.f32 %v353, %v552
        %554 = vmatmul.bf16.gmra.mxu0 %v316
        %v555 = vpop.f32.mrf.mxu0
        %v556 = vadd.f32 %v353, %v555
        %v557 = vpop.f32.mrf.mxu0
        %v558 = vadd.f32 %v353, %v557
        %559 = vmatmul.bf16.gmra.mxu0 %v317
        %v560 = vpop.f32.mrf.mxu0
        %v561 = vadd.f32 %v353, %v560
        %v562 = vpop.f32.mrf.mxu0
        %v563 = vadd.f32 %v353, %v562
        %564 = vmatmul.bf16.gmra.mxu0 %v318
        %v565 = vpop.f32.mrf.mxu0
        %v566 = vadd.f32 %v353, %v565
        %v567 = vpop.f32.mrf.mxu0
        %v568 = vadd.f32 %v353, %v567
        %569 = vdwg.mxu0
        %570 = vmatpush.bf16.msra.mxu0 %v486
        %571 = vmatpush.bf16.msra.mxu0 %v482
        %572 = vmatpush.bf16.msra.mxu0 %v478
        %573 = vmatpush.bf16.msra.mxu0 %v474
        %574 = vmatpush.bf16.msra.mxu0 %v470
        %575 = vmatpush.bf16.msra.mxu0 %v466
        %576 = vmatpush.bf16.msra.mxu0 %v462
        %577 = vmatpush.bf16.msra.mxu0 %v458
        %578 = vmatmul.bf16.gmra.mxu0 %v311
        %v579 = vpop.f32.mrf.mxu0
        %v580 = vadd.f32 %v354, %v579
        %v581 = vpop.f32.mrf.mxu0
        %v582 = vadd.f32 %v354, %v581
        %583 = vmatmul.bf16.gmra.mxu0 %v312
        %v584 = vpop.f32.mrf.mxu0
        %v585 = vadd.f32 %v354, %v584
        %v586 = vpop.f32.mrf.mxu0
        %v587 = vadd.f32 %v354, %v586
        %588 = vmatmul.bf16.gmra.mxu0 %v313
        %v589 = vpop.f32.mrf.mxu0
        %v590 = vadd.f32 %v354, %v589
        %v591 = vpop.f32.mrf.mxu0
        %v592 = vadd.f32 %v354, %v591
        %593 = vmatmul.bf16.gmra.mxu0 %v314
        %v594 = vpop.f32.mrf.mxu0
        %v595 = vadd.f32 %v354, %v594
        %v596 = vpop.f32.mrf.mxu0
        %v597 = vadd.f32 %v354, %v596
        %598 = vmatmul.bf16.gmra.mxu0 %v315
        %v599 = vpop.f32.mrf.mxu0
        %v600 = vadd.f32 %v354, %v599
        %v601 = vpop.f32.mrf.mxu0
        %v602 = vadd.f32 %v354, %v601
        %603 = vmatmul.bf16.gmra.mxu0 %v316
        %v604 = vpop.f32.mrf.mxu0
        %v605 = vadd.f32 %v354, %v604
        %v606 = vpop.f32.mrf.mxu0
        %v607 = vadd.f32 %v354, %v606
        %608 = vmatmul.bf16.gmra.mxu0 %v317
        %v609 = vpop.f32.mrf.mxu0
        %v610 = vadd.f32 %v354, %v609
        %v611 = vpop.f32.mrf.mxu0
        %v612 = vadd.f32 %v354, %v611
        %613 = vmatmul.bf16.gmra.mxu0 %v318
        %v614 = vpop.f32.mrf.mxu0
        %v615 = vadd.f32 %v354, %v614
        %v616 = vpop.f32.mrf.mxu0
        %v617 = vadd.f32 %v354, %v616
        %618 = vdwg.mxu0
        %619 = vmatpush.bf16.msra.mxu0 %v487
        %620 = vmatpush.bf16.msra.mxu0 %v483
        %621 = vmatpush.bf16.msra.mxu0 %v479
        %622 = vmatpush.bf16.msra.mxu0 %v475
        %623 = vmatpush.bf16.msra.mxu0 %v471
        %624 = vmatpush.bf16.msra.mxu0 %v467
        %625 = vmatpush.bf16.msra.mxu0 %v463
        %626 = vmatpush.bf16.msra.mxu0 %v459
        %627 = vmatmul.bf16.gmra.mxu0 %v311
        %v628 = vpop.f32.mrf.mxu0
        %v629 = vadd.f32 %v355, %v628
        %v630 = vpop.f32.mrf.mxu0
        %v631 = vadd.f32 %v355, %v630
        %632 = vmatmul.bf16.gmra.mxu0 %v312
        %v633 = vpop.f32.mrf.mxu0
        %v634 = vadd.f32 %v355, %v633
        %v635 = vpop.f32.mrf.mxu0
        %v636 = vadd.f32 %v355, %v635
        %637 = vmatmul.bf16.gmra.mxu0 %v313
        %v638 = vpop.f32.mrf.mxu0
        %v639 = vadd.f32 %v355, %v638
        %v640 = vpop.f32.mrf.mxu0
        %v641 = vadd.f32 %v355, %v640
        %642 = vmatmul.bf16.gmra.mxu0 %v314
        %v643 = vpop.f32.mrf.mxu0
        %v644 = vadd.f32 %v355, %v643
        %v645 = vpop.f32.mrf.mxu0
        %v646 = vadd.f32 %v355, %v645
        %647 = vmatmul.bf16.gmra.mxu0 %v315
        %v648 = vpop.f32.mrf.mxu0
        %v649 = vadd.f32 %v355, %v648
        %v650 = vpop.f32.mrf.mxu0
        %v651 = vadd.f32 %v355, %v650
        %652 = vmatmul.bf16.gmra.mxu0 %v316
        %v653 = vpop.f32.mrf.mxu0
        %v654 = vadd.f32 %v355, %v653
        %v655 = vpop.f32.mrf.mxu0
        %v656 = vadd.f32 %v355, %v655
        %657 = vmatmul.bf16.gmra.mxu0 %v317
        %v658 = vpop.f32.mrf.mxu0
        %v659 = vadd.f32 %v355, %v658
        %v660 = vpop.f32.mrf.mxu0
        %v661 = vadd.f32 %v355, %v660
        %662 = vmatmul.bf16.gmra.mxu0 %v318
        %v663 = vpop.f32.mrf.mxu0
        %v664 = vadd.f32 %v355, %v663
        %v665 = vpop.f32.mrf.mxu0
        %v666 = vadd.f32 %v355, %v665
        %667 = vdwg.mxu0
        %668 = vmatpush.bf16.msra.mxu0 %v488
        %669 = vmatpush.bf16.msra.mxu0 %v484
        %670 = vmatpush.bf16.msra.mxu0 %v480
        %671 = vmatpush.bf16.msra.mxu0 %v476
        %672 = vmatpush.bf16.msra.mxu0 %v472
        %673 = vmatpush.bf16.msra.mxu0 %v468
        %674 = vmatpush.bf16.msra.mxu0 %v464
        %675 = vmatpush.bf16.msra.mxu0 %v460
        %676 = vmatmul.bf16.gmra.mxu0 %v311
        %v677 = vpop.f32.mrf.mxu0
        %v678 = vadd.f32 %v356, %v677
        %v679 = vpop.f32.mrf.mxu0
        %v680 = vadd.f32 %v356, %v679
        %681 = vmatmul.bf16.gmra.mxu0 %v312
        %v682 = vpop.f32.mrf.mxu0
        %v683 = vadd.f32 %v356, %v682
        %v684 = vpop.f32.mrf.mxu0
        %v685 = vadd.f32 %v356, %v684
        %686 = vmatmul.bf16.gmra.mxu0 %v313
        %v687 = vpop.f32.mrf.mxu0
        %v688 = vadd.f32 %v356, %v687
        %v689 = vpop.f32.mrf.mxu0
        %v690 = vadd.f32 %v356, %v689
        %691 = vmatmul.bf16.gmra.mxu0 %v314
        %v692 = vpop.f32.mrf.mxu0
        %v693 = vadd.f32 %v356, %v692
        %v694 = vpop.f32.mrf.mxu0
        %v695 = vadd.f32 %v356, %v694
        %696 = vmatmul.bf16.gmra.mxu0 %v315
        %v697 = vpop.f32.mrf.mxu0
        %v698 = vadd.f32 %v356, %v697
        %v699 = vpop.f32.mrf.mxu0
        %v700 = vadd.f32 %v356, %v699
        %701 = vmatmul.bf16.gmra.mxu0 %v316
        %v702 = vpop.f32.mrf.mxu0
        %v703 = vadd.f32 %v356, %v702
        %v704 = vpop.f32.mrf.mxu0
        %v705 = vadd.f32 %v356, %v704
        %706 = vmatmul.bf16.gmra.mxu0 %v317
        %v707 = vpop.f32.mrf.mxu0
        %v708 = vadd.f32 %v356, %v707
        %v709 = vpop.f32.mrf.mxu0
        %v710 = vadd.f32 %v356, %v709
        %711 = vmatmul.bf16.gmra.mxu0 %v318
        %v712 = vpop.f32.mrf.mxu0
        %v713 = vadd.f32 %v356, %v712
        %v714 = vpop.f32.mrf.mxu0
        %v715 = vadd.f32 %v356, %v714
        %716 = vdwg.mxu0
        %v717 = vmul.f32 %v531, %v531
        %v718 = vmul.f32 %v580, %v580
        %v719 = vmul.f32 %v629, %v629
        %v720 = vmul.f32 %v678, %v678
        %v721 = vmul.f32 %v533, %v533
        %v722 = vmul.f32 %v582, %v582
        %v723 = vmul.f32 %v631, %v631
        %v724 = vmul.f32 %v680, %v680
        %v725 = vmul.f32 %v536, %v536
        %v726 = vmul.f32 %v585, %v585
        %v727 = vmul.f32 %v634, %v634
        %v728 = vmul.f32 %v683, %v683
        %v729 = vmul.f32 %v538, %v538
        %v730 = vmul.f32 %v587, %v587
        %v731 = vmul.f32 %v636, %v636
        %v732 = vmul.f32 %v685, %v685
        %v733 = vmul.f32 %v541, %v541
        %v734 = vmul.f32 %v590, %v590
        %v735 = vmul.f32 %v639, %v639
        %v736 = vmul.f32 %v688, %v688
        %v737 = vmul.f32 %v543, %v543
        %v738 = vmul.f32 %v592, %v592
        %v739 = vmul.f32 %v641, %v641
        %v740 = vmul.f32 %v690, %v690
        %v741 = vmul.f32 %v546, %v546
        %v742 = vmul.f32 %v595, %v595
        %v743 = vmul.f32 %v644, %v644
        %v744 = vmul.f32 %v693, %v693
        %v745 = vmul.f32 %v548, %v548
        %v746 = vmul.f32 %v597, %v597
        %v747 = vmul.f32 %v646, %v646
        %v748 = vmul.f32 %v695, %v695
        %v749 = vmul.f32 %v551, %v551
        %v750 = vmul.f32 %v600, %v600
        %v751 = vmul.f32 %v649, %v649
        %v752 = vmul.f32 %v698, %v698
        %v753 = vmul.f32 %v553, %v553
        %v754 = vmul.f32 %v602, %v602
        %v755 = vmul.f32 %v651, %v651
        %v756 = vmul.f32 %v700, %v700
        %v757 = vmul.f32 %v556, %v556
        %v758 = vmul.f32 %v605, %v605
        %v759 = vmul.f32 %v654, %v654
        %v760 = vmul.f32 %v703, %v703
        %v761 = vmul.f32 %v558, %v558
        %v762 = vmul.f32 %v607, %v607
        %v763 = vmul.f32 %v656, %v656
        %v764 = vmul.f32 %v705, %v705
        %v765 = vmul.f32 %v561, %v561
        %v766 = vmul.f32 %v610, %v610
        %v767 = vmul.f32 %v659, %v659
        %v768 = vmul.f32 %v708, %v708
        %v769 = vmul.f32 %v563, %v563
        %v770 = vmul.f32 %v612, %v612
        %v771 = vmul.f32 %v661, %v661
        %v772 = vmul.f32 %v710, %v710
        %v773 = vmul.f32 %v566, %v566
        %v774 = vmul.f32 %v615, %v615
        %v775 = vmul.f32 %v664, %v664
        %v776 = vmul.f32 %v713, %v713
        %v777 = vmul.f32 %v568, %v568
        %v778 = vmul.f32 %v617, %v617
        %v779 = vmul.f32 %v666, %v666
        %v780 = vmul.f32 %v715, %v715
        %v781 = vmul.f32 %v531, %v717
        %v782 = vmul.f32 %v580, %v718
        %v783 = vmul.f32 %v629, %v719
        %v784 = vmul.f32 %v678, %v720
        %v785 = vmul.f32 %v533, %v721
        %v786 = vmul.f32 %v582, %v722
        %v787 = vmul.f32 %v631, %v723
        %v788 = vmul.f32 %v680, %v724
        %v789 = vmul.f32 %v536, %v725
        %v790 = vmul.f32 %v585, %v726
        %v791 = vmul.f32 %v634, %v727
        %v792 = vmul.f32 %v683, %v728
        %v793 = vmul.f32 %v538, %v729
        %v794 = vmul.f32 %v587, %v730
        %v795 = vmul.f32 %v636, %v731
        %v796 = vmul.f32 %v685, %v732
        %v797 = vmul.f32 %v541, %v733
        %v798 = vmul.f32 %v590, %v734
        %v799 = vmul.f32 %v639, %v735
        %v800 = vmul.f32 %v688, %v736
        %v801 = vmul.f32 %v543, %v737
        %v802 = vmul.f32 %v592, %v738
        %v803 = vmul.f32 %v641, %v739
        %v804 = vmul.f32 %v690, %v740
        %v805 = vmul.f32 %v546, %v741
        %v806 = vmul.f32 %v595, %v742
        %v807 = vmul.f32 %v644, %v743
        %v808 = vmul.f32 %v693, %v744
        %v809 = vmul.f32 %v548, %v745
        %v810 = vmul.f32 %v597, %v746
        %v811 = vmul.f32 %v646, %v747
        %v812 = vmul.f32 %v695, %v748
        %v813 = vmul.f32 %v551, %v749
        %v814 = vmul.f32 %v600, %v750
        %v815 = vmul.f32 %v649, %v751
        %v816 = vmul.f32 %v698, %v752
        %v817 = vmul.f32 %v553, %v753
        %v818 = vmul.f32 %v602, %v754
        %v819 = vmul.f32 %v651, %v755
        %v820 = vmul.f32 %v700, %v756
        %v821 = vmul.f32 %v556, %v757
        %v822 = vmul.f32 %v605, %v758
        %v823 = vmul.f32 %v654, %v759
        %v824 = vmul.f32 %v703, %v760
        %v825 = vmul.f32 %v558, %v761
        %v826 = vmul.f32 %v607, %v762
        %v827 = vmul.f32 %v656, %v763
        %v828 = vmul.f32 %v705, %v764
        %v829 = vmul.f32 %v561, %v765
        %v830 = vmul.f32 %v610, %v766
        %v831 = vmul.f32 %v659, %v767
        %v832 = vmul.f32 %v708, %v768
        %v833 = vmul.f32 %v563, %v769
        %v834 = vmul.f32 %v612, %v770
        %v835 = vmul.f32 %v661, %v771
        %v836 = vmul.f32 %v710, %v772
        %v837 = vmul.f32 %v566, %v773
        %v838 = vmul.f32 %v615, %v774
        %v839 = vmul.f32 %v664, %v775
        %v840 = vmul.f32 %v713, %v776
        %v841 = vmul.f32 %v568, %v777
        %v842 = vmul.f32 %v617, %v778
        %v843 = vmul.f32 %v666, %v779
        %v844 = vmul.f32 %v715, %v780
        %v845 = vmul.f32 %v781, 0.044715
        %v846 = vmul.f32 %v782, 0.044715
        %v847 = vmul.f32 %v783, 0.044715
        %v848 = vmul.f32 %v784, 0.044715
        %v849 = vmul.f32 %v785, 0.044715
        %v850 = vmul.f32 %v786, 0.044715
        %v851 = vmul.f32 %v787, 0.044715
        %v852 = vmul.f32 %v788, 0.044715
        %v853 = vmul.f32 %v789, 0.044715
        %v854 = vmul.f32 %v790, 0.044715
        %v855 = vmul.f32 %v791, 0.044715
        %v856 = vmul.f32 %v792, 0.044715
        %v857 = vmul.f32 %v793, 0.044715
        %v858 = vmul.f32 %v794, 0.044715
        %v859 = vmul.f32 %v795, 0.044715
        %v860 = vmul.f32 %v796, 0.044715
        %v861 = vmul.f32 %v797, 0.044715
        %v862 = vmul.f32 %v798, 0.044715
        %v863 = vmul.f32 %v799, 0.044715
        %v864 = vmul.f32 %v800, 0.044715
        %v865 = vmul.f32 %v801, 0.044715
        %v866 = vmul.f32 %v802, 0.044715
        %v867 = vmul.f32 %v803, 0.044715
        %v868 = vmul.f32 %v804, 0.044715
        %v869 = vmul.f32 %v805, 0.044715
        %v870 = vmul.f32 %v806, 0.044715
        %v871 = vmul.f32 %v807, 0.044715
        %v872 = vmul.f32 %v808, 0.044715
        %v873 = vmul.f32 %v809, 0.044715
        %v874 = vmul.f32 %v810, 0.044715
        %v875 = vmul.f32 %v811, 0.044715
        %v876 = vmul.f32 %v812, 0.044715
        %v877 = vmul.f32 %v813, 0.044715
        %v878 = vmul.f32 %v814, 0.044715
        %v879 = vmul.f32 %v815, 0.044715
        %v880 = vmul.f32 %v816, 0.044715
        %v881 = vmul.f32 %v817, 0.044715
        %v882 = vmul.f32 %v818, 0.044715
        %v883 = vmul.f32 %v819, 0.044715
        %v884 = vmul.f32 %v820, 0.044715
        %v885 = vmul.f32 %v821, 0.044715
        %v886 = vmul.f32 %v822, 0.044715
        %v887 = vmul.f32 %v823, 0.044715
        %v888 = vmul.f32 %v824, 0.044715
        %v889 = vmul.f32 %v825, 0.044715
        %v890 = vmul.f32 %v826, 0.044715
        %v891 = vmul.f32 %v827, 0.044715
        %v892 = vmul.f32 %v828, 0.044715
        %v893 = vmul.f32 %v829, 0.044715
        %v894 = vmul.f32 %v830, 0.044715
        %v895 = vmul.f32 %v831, 0.044715
        %v896 = vmul.f32 %v832, 0.044715
        %v897 = vmul.f32 %v833, 0.044715
        %v898 = vmul.f32 %v834, 0.044715
        %v899 = vmul.f32 %v835, 0.044715
        %v900 = vmul.f32 %v836, 0.044715
        %v901 = vmul.f32 %v837, 0.044715
        %v902 = vmul.f32 %v838, 0.044715
        %v903 = vmul.f32 %v839, 0.044715
        %v904 = vmul.f32 %v840, 0.044715
        %v905 = vmul.f32 %v841, 0.044715
        %v906 = vmul.f32 %v842, 0.044715
        %v907 = vmul.f32 %v843, 0.044715
        %v908 = vmul.f32 %v844, 0.044715
        %v909 = vadd.f32 %v531, %v845
        %v910 = vadd.f32 %v580, %v846
        %v911 = vadd.f32 %v629, %v847
        %v912 = vadd.f32 %v678, %v848
        %v913 = vadd.f32 %v533, %v849
        %v914 = vadd.f32 %v582, %v850
        %v915 = vadd.f32 %v631, %v851
        %v916 = vadd.f32 %v680, %v852
        %v917 = vadd.f32 %v536, %v853
        %v918 = vadd.f32 %v585, %v854
        %v919 = vadd.f32 %v634, %v855
        %v920 = vadd.f32 %v683, %v856
        %v921 = vadd.f32 %v538, %v857
        %v922 = vadd.f32 %v587, %v858
        %v923 = vadd.f32 %v636, %v859
        %v924 = vadd.f32 %v685, %v860
        %v925 = vadd.f32 %v541, %v861
        %v926 = vadd.f32 %v590, %v862
        %v927 = vadd.f32 %v639, %v863
        %v928 = vadd.f32 %v688, %v864
        %v929 = vadd.f32 %v543, %v865
        %v930 = vadd.f32 %v592, %v866
        %v931 = vadd.f32 %v641, %v867
        %v932 = vadd.f32 %v690, %v868
        %v933 = vadd.f32 %v546, %v869
        %v934 = vadd.f32 %v595, %v870
        %v935 = vadd.f32 %v644, %v871
        %v936 = vadd.f32 %v693, %v872
        %v937 = vadd.f32 %v548, %v873
        %v938 = vadd.f32 %v597, %v874
        %v939 = vadd.f32 %v646, %v875
        %v940 = vadd.f32 %v695, %v876
        %v941 = vadd.f32 %v551, %v877
        %v942 = vadd.f32 %v600, %v878
        %v943 = vadd.f32 %v649, %v879
        %v944 = vadd.f32 %v698, %v880
        %v945 = vadd.f32 %v553, %v881
        %v946 = vadd.f32 %v602, %v882
        %v947 = vadd.f32 %v651, %v883
        %v948 = vadd.f32 %v700, %v884
        %v949 = vadd.f32 %v556, %v885
        %v950 = vadd.f32 %v605, %v886
        %v951 = vadd.f32 %v654, %v887
        %v952 = vadd.f32 %v703, %v888
        %v953 = vadd.f32 %v558, %v889
        %v954 = vadd.f32 %v607, %v890
        %v955 = vadd.f32 %v656, %v891
        %v956 = vadd.f32 %v705, %v892
        %v957 = vadd.f32 %v561, %v893
        %v958 = vadd.f32 %v610, %v894
        %v959 = vadd.f32 %v659, %v895
        %v960 = vadd.f32 %v708, %v896
        %v961 = vadd.f32 %v563, %v897
        %v962 = vadd.f32 %v612, %v898
        %v963 = vadd.f32 %v661, %v899
        %v964 = vadd.f32 %v710, %v900
        %v965 = vadd.f32 %v566, %v901
        %v966 = vadd.f32 %v615, %v902
        %v967 = vadd.f32 %v664, %v903
        %v968 = vadd.f32 %v713, %v904
        %v969 = vadd.f32 %v568, %v905
        %v970 = vadd.f32 %v617, %v906
        %v971 = vadd.f32 %v666, %v907
        %v972 = vadd.f32 %v715, %v908
        %v973 = vmul.f32 %v909, 0.7978846
        %v974 = vmul.f32 %v910, 0.7978846
        %v975 = vmul.f32 %v911, 0.7978846
        %v976 = vmul.f32 %v912, 0.7978846
        %v977 = vmul.f32 %v913, 0.7978846
        %v978 = vmul.f32 %v914, 0.7978846
        %v979 = vmul.f32 %v915, 0.7978846
        %v980 = vmul.f32 %v916, 0.7978846
        %v981 = vmul.f32 %v917, 0.7978846
        %v982 = vmul.f32 %v918, 0.7978846
        %v983 = vmul.f32 %v919, 0.7978846
        %v984 = vmul.f32 %v920, 0.7978846
        %v985 = vmul.f32 %v921, 0.7978846
        %v986 = vmul.f32 %v922, 0.7978846
        %v987 = vmul.f32 %v923, 0.7978846
        %v988 = vmul.f32 %v924, 0.7978846
        %v989 = vmul.f32 %v925, 0.7978846
        %v990 = vmul.f32 %v926, 0.7978846
        %v991 = vmul.f32 %v927, 0.7978846
        %v992 = vmul.f32 %v928, 0.7978846
        %v993 = vmul.f32 %v929, 0.7978846
        %v994 = vmul.f32 %v930, 0.7978846
        %v995 = vmul.f32 %v931, 0.7978846
        %v996 = vmul.f32 %v932, 0.7978846
        %v997 = vmul.f32 %v933, 0.7978846
        %v998 = vmul.f32 %v934, 0.7978846
        %v999 = vmul.f32 %v935, 0.7978846
        %v1000 = vmul.f32 %v936, 0.7978846
        %v1001 = vmul.f32 %v937, 0.7978846
        %v1002 = vmul.f32 %v938, 0.7978846
        %v1003 = vmul.f32 %v939, 0.7978846
        %v1004 = vmul.f32 %v940, 0.7978846
        %v1005 = vmul.f32 %v941, 0.7978846
        %v1006 = vmul.f32 %v942, 0.7978846
        %v1007 = vmul.f32 %v943, 0.7978846
        %v1008 = vmul.f32 %v944, 0.7978846
        %v1009 = vmul.f32 %v945, 0.7978846
        %v1010 = vmul.f32 %v946, 0.7978846
        %v1011 = vmul.f32 %v947, 0.7978846
        %v1012 = vmul.f32 %v948, 0.7978846
        %v1013 = vmul.f32 %v949, 0.7978846
        %v1014 = vmul.f32 %v950, 0.7978846
        %v1015 = vmul.f32 %v951, 0.7978846
        %v1016 = vmul.f32 %v952, 0.7978846
        %v1017 = vmul.f32 %v953, 0.7978846
        %v1018 = vmul.f32 %v954, 0.7978846
        %v1019 = vmul.f32 %v955, 0.7978846
        %v1020 = vmul.f32 %v956, 0.7978846
        %v1021 = vmul.f32 %v957, 0.7978846
        %v1022 = vmul.f32 %v958, 0.7978846
        %v1023 = vmul.f32 %v959, 0.7978846
        %v1024 = vmul.f32 %v960, 0.7978846
        %v1025 = vmul.f32 %v961, 0.7978846
        %v1026 = vmul.f32 %v962, 0.7978846
        %v1027 = vmul.f32 %v963, 0.7978846
        %v1028 = vmul.f32 %v964, 0.7978846
        %v1029 = vmul.f32 %v965, 0.7978846
        %v1030 = vmul.f32 %v966, 0.7978846
        %v1031 = vmul.f32 %v967, 0.7978846
        %v1032 = vmul.f32 %v968, 0.7978846
        %v1033 = vmul.f32 %v969, 0.7978846
        %v1034 = vmul.f32 %v970, 0.7978846
        %v1035 = vmul.f32 %v971, 0.7978846
        %v1036 = vmul.f32 %v972, 0.7978846
        %v1037 = vtanh.pop %v973
        %v1038 = vtanh.pop %v974
        %v1039 = vtanh.pop %v975
        %v1040 = vtanh.pop %v976
        %v1041 = vtanh.pop %v977
        %v1042 = vtanh.pop %v978
        %v1043 = vtanh.pop %v979
        %v1044 = vtanh.pop %v980
        %v1045 = vtanh.pop %v981
        %v1046 = vtanh.pop %v982
        %v1047 = vtanh.pop %v983
        %v1048 = vtanh.pop %v984
        %v1049 = vtanh.pop %v985
        %v1050 = vtanh.pop %v986
        %v1051 = vtanh.pop %v987
        %v1052 = vtanh.pop %v988
        %v1053 = vtanh.pop %v989
        %v1054 = vtanh.pop %v990
        %v1055 = vtanh.pop %v991
        %v1056 = vtanh.pop %v992
        %v1057 = vtanh.pop %v993
        %v1058 = vtanh.pop %v994
        %v1059 = vtanh.pop %v995
        %v1060 = vtanh.pop %v996
        %v1061 = vtanh.pop %v997
        %v1062 = vtanh.pop %v998
        %v1063 = vtanh.pop %v999
        %v1064 = vtanh.pop %v1000
        %v1065 = vtanh.pop %v1001
        %v1066 = vtanh.pop %v1002
        %v1067 = vtanh.pop %v1003
        %v1068 = vtanh.pop %v1004
        %v1069 = vtanh.pop %v1005
        %v1070 = vtanh.pop %v1006
        %v1071 = vtanh.pop %v1007
        %v1072 = vtanh.pop %v1008
        %v1073 = vtanh.pop %v1009
        %v1074 = vtanh.pop %v1010
        %v1075 = vtanh.pop %v1011
        %v1076 = vtanh.pop %v1012
        %v1077 = vtanh.pop %v1013
        %v1078 = vtanh.pop %v1014
        %v1079 = vtanh.pop %v1015
        %v1080 = vtanh.pop %v1016
        %v1081 = vtanh.pop %v1017
        %v1082 = vtanh.pop %v1018
        %v1083 = vtanh.pop %v1019
        %v1084 = vtanh.pop %v1020
        %v1085 = vtanh.pop %v1021
        %v1086 = vtanh.pop %v1022
        %v1087 = vtanh.pop %v1023
        %v1088 = vtanh.pop %v1024
        %v1089 = vtanh.pop %v1025
        %v1090 = vtanh.pop %v1026
        %v1091 = vtanh.pop %v1027
        %v1092 = vtanh.pop %v1028
        %v1093 = vtanh.pop %v1029
        %v1094 = vtanh.pop %v1030
        %v1095 = vtanh.pop %v1031
        %v1096 = vtanh.pop %v1032
        %v1097 = vtanh.pop %v1033
        %v1098 = vtanh.pop %v1034
        %v1099 = vtanh.pop %v1035
        %v1100 = vtanh.pop %v1036
        %v1101 = vadd.f32 %v1037, 1.0
        %v1102 = vadd.f32 %v1038, 1.0
        %v1103 = vadd.f32 %v1039, 1.0
        %v1104 = vadd.f32 %v1040, 1.0
        %v1105 = vadd.f32 %v1041, 1.0
        %v1106 = vadd.f32 %v1042, 1.0
        %v1107 = vadd.f32 %v1043, 1.0
        %v1108 = vadd.f32 %v1044, 1.0
        %v1109 = vadd.f32 %v1045, 1.0
        %v1110 = vadd.f32 %v1046, 1.0
        %v1111 = vadd.f32 %v1047, 1.0
        %v1112 = vadd.f32 %v1048, 1.0
        %v1113 = vadd.f32 %v1049, 1.0
        %v1114 = vadd.f32 %v1050, 1.0
        %v1115 = vadd.f32 %v1051, 1.0
        %v1116 = vadd.f32 %v1052, 1.0
        %v1117 = vadd.f32 %v1053, 1.0
        %v1118 = vadd.f32 %v1054, 1.0
        %v1119 = vadd.f32 %v1055, 1.0
        %v1120 = vadd.f32 %v1056, 1.0
        %v1121 = vadd.f32 %v1057, 1.0
        %v1122 = vadd.f32 %v1058, 1.0
        %v1123 = vadd.f32 %v1059, 1.0
        %v1124 = vadd.f32 %v1060, 1.0
        %v1125 = vadd.f32 %v1061, 1.0
        %v1126 = vadd.f32 %v1062, 1.0
        %v1127 = vadd.f32 %v1063, 1.0
        %v1128 = vadd.f32 %v1064, 1.0
        %v1129 = vadd.f32 %v1065, 1.0
        %v1130 = vadd.f32 %v1066, 1.0
        %v1131 = vadd.f32 %v1067, 1.0
        %v1132 = vadd.f32 %v1068, 1.0
        %v1133 = vadd.f32 %v1069, 1.0
        %v1134 = vadd.f32 %v1070, 1.0
        %v1135 = vadd.f32 %v1071, 1.0
        %v1136 = vadd.f32 %v1072, 1.0
        %v1137 = vadd.f32 %v1073, 1.0
        %v1138 = vadd.f32 %v1074, 1.0
        %v1139 = vadd.f32 %v1075, 1.0
        %v1140 = vadd.f32 %v1076, 1.0
        %v1141 = vadd.f32 %v1077, 1.0
        %v1142 = vadd.f32 %v1078, 1.0
        %v1143 = vadd.f32 %v1079, 1.0
        %v1144 = vadd.f32 %v1080, 1.0
        %v1145 = vadd.f32 %v1081, 1.0
        %v1146 = vadd.f32 %v1082, 1.0
        %v1147 = vadd.f32 %v1083, 1.0
        %v1148 = vadd.f32 %v1084, 1.0
        %v1149 = vadd.f32 %v1085, 1.0
        %v1150 = vadd.f32 %v1086, 1.0
        %v1151 = vadd.f32 %v1087, 1.0
        %v1152 = vadd.f32 %v1088, 1.0
        %v1153 = vadd.f32 %v1089, 1.0
        %v1154 = vadd.f32 %v1090, 1.0
        %v1155 = vadd.f32 %v1091, 1.0
        %v1156 = vadd.f32 %v1092, 1.0
        %v1157 = vadd.f32 %v1093, 1.0
        %v1158 = vadd.f32 %v1094, 1.0
        %v1159 = vadd.f32 %v1095, 1.0
        %v1160 = vadd.f32 %v1096, 1.0
        %v1161 = vadd.f32 %v1097, 1.0
        %v1162 = vadd.f32 %v1098, 1.0
        %v1163 = vadd.f32 %v1099, 1.0
        %v1164 = vadd.f32 %v1100, 1.0
        %v1165 = vmul.f32 %v1101, 0.5
        %v1166 = vmul.f32 %v1102, 0.5
        %v1167 = vmul.f32 %v1103, 0.5
        %v1168 = vmul.f32 %v1104, 0.5
        %v1169 = vmul.f32 %v1105, 0.5
        %v1170 = vmul.f32 %v1106, 0.5
        %v1171 = vmul.f32 %v1107, 0.5
        %v1172 = vmul.f32 %v1108, 0.5
        %v1173 = vmul.f32 %v1109, 0.5
        %v1174 = vmul.f32 %v1110, 0.5
        %v1175 = vmul.f32 %v1111, 0.5
        %v1176 = vmul.f32 %v1112, 0.5
        %v1177 = vmul.f32 %v1113, 0.5
        %v1178 = vmul.f32 %v1114, 0.5
        %v1179 = vmul.f32 %v1115, 0.5
        %v1180 = vmul.f32 %v1116, 0.5
        %v1181 = vmul.f32 %v1117, 0.5
        %v1182 = vmul.f32 %v1118, 0.5
        %v1183 = vmul.f32 %v1119, 0.5
        %v1184 = vmul.f32 %v1120, 0.5
        %v1185 = vmul.f32 %v1121, 0.5
        %v1186 = vmul.f32 %v1122, 0.5
        %v1187 = vmul.f32 %v1123, 0.5
        %v1188 = vmul.f32 %v1124, 0.5
        %v1189 = vmul.f32 %v1125, 0.5
        %v1190 = vmul.f32 %v1126, 0.5
        %v1191 = vmul.f32 %v1127, 0.5
        %v1192 = vmul.f32 %v1128, 0.5
        %v1193 = vmul.f32 %v1129, 0.5
        %v1194 = vmul.f32 %v1130, 0.5
        %v1195 = vmul.f32 %v1131, 0.5
        %v1196 = vmul.f32 %v1132, 0.5
        %v1197 = vmul.f32 %v1133, 0.5
        %v1198 = vmul.f32 %v1134, 0.5
        %v1199 = vmul.f32 %v1135, 0.5
        %v1200 = vmul.f32 %v1136, 0.5
        %v1201 = vmul.f32 %v1137, 0.5
        %v1202 = vmul.f32 %v1138, 0.5
        %v1203 = vmul.f32 %v1139, 0.5
        %v1204 = vmul.f32 %v1140, 0.5
        %v1205 = vmul.f32 %v1141, 0.5
        %v1206 = vmul.f32 %v1142, 0.5
        %v1207 = vmul.f32 %v1143, 0.5
        %v1208 = vmul.f32 %v1144, 0.5
        %v1209 = vmul.f32 %v1145, 0.5
        %v1210 = vmul.f32 %v1146, 0.5
        %v1211 = vmul.f32 %v1147, 0.5
        %v1212 = vmul.f32 %v1148, 0.5
        %v1213 = vmul.f32 %v1149, 0.5
        %v1214 = vmul.f32 %v1150, 0.5
        %v1215 = vmul.f32 %v1151, 0.5
        %v1216 = vmul.f32 %v1152, 0.5
        %v1217 = vmul.f32 %v1153, 0.5
        %v1218 = vmul.f32 %v1154, 0.5
        %v1219 = vmul.f32 %v1155, 0.5
        %v1220 = vmul.f32 %v1156, 0.5
        %v1221 = vmul.f32 %v1157, 0.5
        %v1222 = vmul.f32 %v1158, 0.5
        %v1223 = vmul.f32 %v1159, 0.5
        %v1224 = vmul.f32 %v1160, 0.5
        %v1225 = vmul.f32 %v1161, 0.5
        %v1226 = vmul.f32 %v1162, 0.5
        %v1227 = vmul.f32 %v1163, 0.5
        %v1228 = vmul.f32 %v1164, 0.5
        %v1229 = vmul.f32 %v531, %v1165
        %v1230 = vmul.f32 %v580, %v1166
        %v1231 = vmul.f32 %v629, %v1167
        %v1232 = vmul.f32 %v678, %v1168
        %v1233 = vmul.f32 %v533, %v1169
        %v1234 = vmul.f32 %v582, %v1170
        %v1235 = vmul.f32 %v631, %v1171
        %v1236 = vmul.f32 %v680, %v1172
        %v1237 = vmul.f32 %v536, %v1173
        %v1238 = vmul.f32 %v585, %v1174
        %v1239 = vmul.f32 %v634, %v1175
        %v1240 = vmul.f32 %v683, %v1176
        %v1241 = vmul.f32 %v538, %v1177
        %v1242 = vmul.f32 %v587, %v1178
        %v1243 = vmul.f32 %v636, %v1179
        %v1244 = vmul.f32 %v685, %v1180
        %v1245 = vmul.f32 %v541, %v1181
        %v1246 = vmul.f32 %v590, %v1182
        %v1247 = vmul.f32 %v639, %v1183
        %v1248 = vmul.f32 %v688, %v1184
        %v1249 = vmul.f32 %v543, %v1185
        %v1250 = vmul.f32 %v592, %v1186
        %v1251 = vmul.f32 %v641, %v1187
        %v1252 = vmul.f32 %v690, %v1188
        %v1253 = vmul.f32 %v546, %v1189
        %v1254 = vmul.f32 %v595, %v1190
        %v1255 = vmul.f32 %v644, %v1191
        %v1256 = vmul.f32 %v693, %v1192
        %v1257 = vmul.f32 %v548, %v1193
        %v1258 = vmul.f32 %v597, %v1194
        %v1259 = vmul.f32 %v646, %v1195
        %v1260 = vmul.f32 %v695, %v1196
        %v1261 = vmul.f32 %v551, %v1197
        %v1262 = vmul.f32 %v600, %v1198
        %v1263 = vmul.f32 %v649, %v1199
        %v1264 = vmul.f32 %v698, %v1200
        %v1265 = vmul.f32 %v553, %v1201
        %v1266 = vmul.f32 %v602, %v1202
        %v1267 = vmul.f32 %v651, %v1203
        %v1268 = vmul.f32 %v700, %v1204
        %v1269 = vmul.f32 %v556, %v1205
        %v1270 = vmul.f32 %v605, %v1206
        %v1271 = vmul.f32 %v654, %v1207
        %v1272 = vmul.f32 %v703, %v1208
        %v1273 = vmul.f32 %v558, %v1209
        %v1274 = vmul.f32 %v607, %v1210
        %v1275 = vmul.f32 %v656, %v1211
        %v1276 = vmul.f32 %v705, %v1212
        %v1277 = vmul.f32 %v561, %v1213
        %v1278 = vmul.f32 %v610, %v1214
        %v1279 = vmul.f32 %v659, %v1215
        %v1280 = vmul.f32 %v708, %v1216
        %v1281 = vmul.f32 %v563, %v1217
        %v1282 = vmul.f32 %v612, %v1218
        %v1283 = vmul.f32 %v661, %v1219
        %v1284 = vmul.f32 %v710, %v1220
        %v1285 = vmul.f32 %v566, %v1221
        %v1286 = vmul.f32 %v615, %v1222
        %v1287 = vmul.f32 %v664, %v1223
        %v1288 = vmul.f32 %v713, %v1224
        %v1289 = vmul.f32 %v568, %v1225
        %v1290 = vmul.f32 %v617, %v1226
        %v1291 = vmul.f32 %v666, %v1227
        %v1292 = vmul.f32 %v715, %v1228
        %v1293 = vpack.c.bf16 %v1233, %v1229
        %v1294 = vpack.c.bf16 %v1234, %v1230
        %v1295 = vpack.c.bf16 %v1235, %v1231
        %v1296 = vpack.c.bf16 %v1236, %v1232
        %v1297 = vpack.c.bf16 %v1241, %v1237
        %v1298 = vpack.c.bf16 %v1242, %v1238
        %v1299 = vpack.c.bf16 %v1243, %v1239
        %v1300 = vpack.c.bf16 %v1244, %v1240
        %v1301 = vpack.c.bf16 %v1249, %v1245
        %v1302 = vpack.c.bf16 %v1250, %v1246
        %v1303 = vpack.c.bf16 %v1251, %v1247
        %v1304 = vpack.c.bf16 %v1252, %v1248
        %v1305 = vpack.c.bf16 %v1257, %v1253
        %v1306 = vpack.c.bf16 %v1258, %v1254
        %v1307 = vpack.c.bf16 %v1259, %v1255
        %v1308 = vpack.c.bf16 %v1260, %v1256
        %v1309 = vpack.c.bf16 %v1265, %v1261
        %v1310 = vpack.c.bf16 %v1266, %v1262
        %v1311 = vpack.c.bf16 %v1267, %v1263
        %v1312 = vpack.c.bf16 %v1268, %v1264
        %v1313 = vpack.c.bf16 %v1273, %v1269
        %v1314 = vpack.c.bf16 %v1274, %v1270
        %v1315 = vpack.c.bf16 %v1275, %v1271
        %v1316 = vpack.c.bf16 %v1276, %v1272
        %v1317 = vpack.c.bf16 %v1281, %v1277
        %v1318 = vpack.c.bf16 %v1282, %v1278
        %v1319 = vpack.c.bf16 %v1283, %v1279
        %v1320 = vpack.c.bf16 %v1284, %v1280
        %v1321 = vpack.c.bf16 %v1289, %v1285
        %v1322 = vpack.c.bf16 %v1290, %v1286
        %v1323 = vpack.c.bf16 %v1291, %v1287
        %v1324 = vpack.c.bf16 %v1292, %v1288
        %v1325 = vld [vmem:[#allocation8] sm:$0xf]
        %v1326 = vld [vmem:[#allocation8 + $0x4] sm:$0xf]
        %v1327 = vld [vmem:[#allocation8 + $0x8] sm:$0xf]
        %v1328 = vld [vmem:[#allocation8 + $0xc] sm:$0xf]
        %v1329 = vld [vmem:[#allocation8 + $0x10] sm:$0xf]
        %v1330 = vld [vmem:[#allocation8 + $0x14] sm:$0xf]
        %v1331 = vld [vmem:[#allocation8 + $0x18] sm:$0xf]
        %v1332 = vld [vmem:[#allocation8 + $0x1c] sm:$0xf]
        %v1333 = vld [vmem:[#allocation8 + $0x20] sm:$0xf]
        %v1334 = vld [vmem:[#allocation8 + $0x24] sm:$0xf]
        %v1335 = vld [vmem:[#allocation8 + $0x28] sm:$0xf]
        %v1336 = vld [vmem:[#allocation8 + $0x2c] sm:$0xf]
        %v1337 = vld [vmem:[#allocation8 + $0x30] sm:$0xf]
        %v1338 = vld [vmem:[#allocation8 + $0x34] sm:$0xf]
        %v1339 = vld [vmem:[#allocation8 + $0x38] sm:$0xf]
        %v1340 = vld [vmem:[#allocation8 + $0x3c] sm:$0xf]
        %v1341 = vld [vmem:[#allocation8 + $0x40] sm:$0xf]
        %v1342 = vld [vmem:[#allocation8 + $0x44] sm:$0xf]
        %v1343 = vld [vmem:[#allocation8 + $0x48] sm:$0xf]
        %v1344 = vld [vmem:[#allocation8 + $0x4c] sm:$0xf]
        %v1345 = vld [vmem:[#allocation8 + $0x50] sm:$0xf]
        %v1346 = vld [vmem:[#allocation8 + $0x54] sm:$0xf]
        %v1347 = vld [vmem:[#allocation8 + $0x58] sm:$0xf]
        %v1348 = vld [vmem:[#allocation8 + $0x5c] sm:$0xf]
        %v1349 = vld [vmem:[#allocation8 + $0x60] sm:$0xf]
        %v1350 = vld [vmem:[#allocation8 + $0x64] sm:$0xf]
        %v1351 = vld [vmem:[#allocation8 + $0x68] sm:$0xf]
        %v1352 = vld [vmem:[#allocation8 + $0x6c] sm:$0xf]
        %v1353 = vld [vmem:[#allocation8 + $0x70] sm:$0xf]
        %v1354 = vld [vmem:[#allocation8 + $0x74] sm:$0xf]
        %v1355 = vld [vmem:[#allocation8 + $0x78] sm:$0xf]
        %v1356 = vld [vmem:[#allocation8 + $0x7c] sm:$0xf]
        %v1357 = vld [vmem:[#allocation8 + $0x80] sm:$0xf]
        %v1358 = vld [vmem:[#allocation8 + $0x84] sm:$0xf]
        %v1359 = vld [vmem:[#allocation8 + $0x88] sm:$0xf]
        %v1360 = vld [vmem:[#allocation8 + $0x8c] sm:$0xf]
        %v1361 = vld [vmem:[#allocation8 + $0x90] sm:$0xf]
        %v1362 = vld [vmem:[#allocation8 + $0x94] sm:$0xf]
        %v1363 = vld [vmem:[#allocation8 + $0x98] sm:$0xf]
        %v1364 = vld [vmem:[#allocation8 + $0x9c] sm:$0xf]
        %v1365 = vld [vmem:[#allocation8 + $0xa0] sm:$0xf]
        %v1366 = vld [vmem:[#allocation8 + $0xa4] sm:$0xf]
        %v1367 = vld [vmem:[#allocation8 + $0xa8] sm:$0xf]
        %v1368 = vld [vmem:[#allocation8 + $0xac] sm:$0xf]
        %v1369 = vld [vmem:[#allocation8 + $0xb0] sm:$0xf]
        %v1370 = vld [vmem:[#allocation8 + $0xb4] sm:$0xf]
        %v1371 = vld [vmem:[#allocation8 + $0xb8] sm:$0xf]
        %v1372 = vld [vmem:[#allocation8 + $0xbc] sm:$0xf]
        %v1373 = vld [vmem:[#allocation8 + $0xc0] sm:$0xf]
        %v1374 = vld [vmem:[#allocation8 + $0xc4] sm:$0xf]
        %v1375 = vld [vmem:[#allocation8 + $0xc8] sm:$0xf]
        %v1376 = vld [vmem:[#allocation8 + $0xcc] sm:$0xf]
        %v1377 = vld [vmem:[#allocation8 + $0xd0] sm:$0xf]
        %v1378 = vld [vmem:[#allocation8 + $0xd4] sm:$0xf]
        %v1379 = vld [vmem:[#allocation8 + $0xd8] sm:$0xf]
        %v1380 = vld [vmem:[#allocation8 + $0xdc] sm:$0xf]
        %v1381 = vld [vmem:[#allocation8 + $0xe0] sm:$0xf]
        %v1382 = vld [vmem:[#allocation8 + $0xe4] sm:$0xf]
        %v1383 = vld [vmem:[#allocation8 + $0xe8] sm:$0xf]
        %v1384 = vld [vmem:[#allocation8 + $0xec] sm:$0xf]
        %v1385 = vld [vmem:[#allocation8 + $0xf0] sm:$0xf]
        %v1386 = vld [vmem:[#allocation8 + $0xf4] sm:$0xf]
        %v1387 = vld [vmem:[#allocation8 + $0xf8] sm:$0xf]
        %v1388 = vld [vmem:[#allocation8 + $0xfc] sm:$0xf]
        %v1389 = vld [vmem:[%s4] sm:$0x1]
        %v1391 = vperm.slane %v1389, 0
        %v1457 = vunpack.c.l.b16 %v1325
        %v1458 = vunpack.c.l.b16 %v1326
        %v1459 = vunpack.c.l.b16 %v1327
        %v1460 = vunpack.c.l.b16 %v1328
        %v1461 = vunpack.c.l.b16 %v1329
        %v1462 = vunpack.c.l.b16 %v1330
        %v1463 = vunpack.c.l.b16 %v1331
        %v1464 = vunpack.c.l.b16 %v1332
        %v1465 = vunpack.c.l.b16 %v1333
        %v1466 = vunpack.c.l.b16 %v1334
        %v1467 = vunpack.c.l.b16 %v1335
        %v1468 = vunpack.c.l.b16 %v1336
        %v1469 = vunpack.c.l.b16 %v1337
        %v1470 = vunpack.c.l.b16 %v1338
        %v1471 = vunpack.c.l.b16 %v1339
        %v1472 = vunpack.c.l.b16 %v1340
        %v1473 = vunpack.c.l.b16 %v1341
        %v1474 = vunpack.c.l.b16 %v1342
        %v1475 = vunpack.c.l.b16 %v1343
        %v1476 = vunpack.c.l.b16 %v1344
        %v1477 = vunpack.c.l.b16 %v1345
        %v1478 = vunpack.c.l.b16 %v1346
        %v1479 = vunpack.c.l.b16 %v1347
        %v1480 = vunpack.c.l.b16 %v1348
        %v1481 = vunpack.c.l.b16 %v1349
        %v1482 = vunpack.c.l.b16 %v1350
        %v1483 = vunpack.c.l.b16 %v1351
        %v1484 = vunpack.c.l.b16 %v1352
        %v1485 = vunpack.c.l.b16 %v1353
        %v1486 = vunpack.c.l.b16 %v1354
        %v1487 = vunpack.c.l.b16 %v1355
        %v1488 = vunpack.c.l.b16 %v1356
        %v1489 = vunpack.c.l.b16 %v1357
        %v1490 = vunpack.c.l.b16 %v1358
        %v1491 = vunpack.c.l.b16 %v1359
        %v1492 = vunpack.c.l.b16 %v1360
        %v1493 = vunpack.c.l.b16 %v1361
        %v1494 = vunpack.c.l.b16 %v1362
        %v1495 = vunpack.c.l.b16 %v1363
        %v1496 = vunpack.c.l.b16 %v1364
        %v1497 = vunpack.c.l.b16 %v1365
        %v1498 = vunpack.c.l.b16 %v1366
        %v1499 = vunpack.c.l.b16 %v1367
        %v1500 = vunpack.c.l.b16 %v1368
        %v1501 = vunpack.c.l.b16 %v1369
        %v1502 = vunpack.c.l.b16 %v1370
        %v1503 = vunpack.c.l.b16 %v1371
        %v1504 = vunpack.c.l.b16 %v1372
        %v1505 = vunpack.c.l.b16 %v1373
        %v1506 = vunpack.c.l.b16 %v1374
        %v1507 = vunpack.c.l.b16 %v1375
        %v1508 = vunpack.c.l.b16 %v1376
        %v1509 = vunpack.c.l.b16 %v1377
        %v1510 = vunpack.c.l.b16 %v1378
        %v1511 = vunpack.c.l.b16 %v1379
        %v1512 = vunpack.c.l.b16 %v1380
        %v1513 = vunpack.c.l.b16 %v1381
        %v1514 = vunpack.c.l.b16 %v1382
        %v1515 = vunpack.c.l.b16 %v1383
        %v1516 = vunpack.c.l.b16 %v1384
        %v1517 = vunpack.c.l.b16 %v1385
        %v1518 = vunpack.c.l.b16 %v1386
        %v1519 = vunpack.c.l.b16 %v1387
        %v1520 = vunpack.c.l.b16 %v1388
        %v1521 = vpack.c.b16 %v1458, %v1457
        %v1522 = vpack.c.b16 %v1460, %v1459
        %v1523 = vpack.c.b16 %v1462, %v1461
        %v1524 = vpack.c.b16 %v1464, %v1463
        %v1525 = vpack.c.b16 %v1466, %v1465
        %v1526 = vpack.c.b16 %v1468, %v1467
        %v1527 = vpack.c.b16 %v1470, %v1469
        %v1528 = vpack.c.b16 %v1472, %v1471
        %v1529 = vpack.c.b16 %v1474, %v1473
        %v1530 = vpack.c.b16 %v1476, %v1475
        %v1531 = vpack.c.b16 %v1478, %v1477
        %v1532 = vpack.c.b16 %v1480, %v1479
        %v1533 = vpack.c.b16 %v1482, %v1481
        %v1534 = vpack.c.b16 %v1484, %v1483
        %v1535 = vpack.c.b16 %v1486, %v1485
        %v1536 = vpack.c.b16 %v1488, %v1487
        %v1537 = vpack.c.b16 %v1490, %v1489
        %v1538 = vpack.c.b16 %v1492, %v1491
        %v1539 = vpack.c.b16 %v1494, %v1493
        %v1540 = vpack.c.b16 %v1496, %v1495
        %v1541 = vpack.c.b16 %v1498, %v1497
        %v1542 = vpack.c.b16 %v1500, %v1499
        %v1543 = vpack.c.b16 %v1502, %v1501
        %v1544 = vpack.c.b16 %v1504, %v1503
        %v1545 = vpack.c.b16 %v1506, %v1505
        %v1546 = vpack.c.b16 %v1508, %v1507
        %v1547 = vpack.c.b16 %v1510, %v1509
        %v1548 = vpack.c.b16 %v1512, %v1511
        %v1549 = vpack.c.b16 %v1514, %v1513
        %v1550 = vpack.c.b16 %v1516, %v1515
        %v1551 = vpack.c.b16 %v1518, %v1517
        %v1552 = vpack.c.b16 %v1520, %v1519
        %1585 = vmatpush.bf16.msra.mxu0 %v1528
        %1586 = vmatpush.bf16.msra.mxu0 %v1527
        %1587 = vmatpush.bf16.msra.mxu0 %v1526
        %1588 = vmatpush.bf16.msra.mxu0 %v1525
        %1589 = vmatpush.bf16.msra.mxu0 %v1524
        %1590 = vmatpush.bf16.msra.mxu0 %v1523
        %1591 = vmatpush.bf16.msra.mxu0 %v1522
        %1592 = vmatpush.bf16.msra.mxu0 %v1521
        %1593 = vmatmul.bf16.gmra.mxu0 %v1293
        %v1594 = vpop.f32.mrf.mxu0
        %v1595 = vadd.f32 %v1391, %v1594
        %v1596 = vpop.f32.mrf.mxu0
        %v1597 = vadd.f32 %v1391, %v1596
        %1598 = vmatmul.bf16.gmra.mxu0 %v1297
        %v1599 = vpop.f32.mrf.mxu0
        %v1600 = vadd.f32 %v1391, %v1599
        %v1601 = vpop.f32.mrf.mxu0
        %v1602 = vadd.f32 %v1391, %v1601
        %1603 = vmatmul.bf16.gmra.mxu0 %v1301
        %v1604 = vpop.f32.mrf.mxu0
        %v1605 = vadd.f32 %v1391, %v1604
        %v1606 = vpop.f32.mrf.mxu0
        %v1607 = vadd.f32 %v1391, %v1606
        %1608 = vmatmul.bf16.gmra.mxu0 %v1305
        %v1609 = vpop.f32.mrf.mxu0
        %v1610 = vadd.f32 %v1391, %v1609
        %v1611 = vpop.f32.mrf.mxu0
        %v1612 = vadd.f32 %v1391, %v1611
        %1613 = vmatmul.bf16.gmra.mxu0 %v1309
        %v1614 = vpop.f32.mrf.mxu0
        %v1615 = vadd.f32 %v1391, %v1614
        %v1616 = vpop.f32.mrf.mxu0
        %v1617 = vadd.f32 %v1391, %v1616
        %1618 = vmatmul.bf16.gmra.mxu0 %v1313
        %v1619 = vpop.f32.mrf.mxu0
        %v1620 = vadd.f32 %v1391, %v1619
        %v1621 = vpop.f32.mrf.mxu0
        %v1622 = vadd.f32 %v1391, %v1621
        %1623 = vmatmul.bf16.gmra.mxu0 %v1317
        %v1624 = vpop.f32.mrf.mxu0
        %v1625 = vadd.f32 %v1391, %v1624
        %v1626 = vpop.f32.mrf.mxu0
        %v1627 = vadd.f32 %v1391, %v1626
        %1628 = vmatmul.bf16.gmra.mxu0 %v1321
        %v1629 = vpop.f32.mrf.mxu0
        %v1630 = vadd.f32 %v1391, %v1629
        %v1631 = vpop.f32.mrf.mxu0
        %v1632 = vadd.f32 %v1391, %v1631
        %1633 = vdwg.mxu0
        %1634 = vmatpush.bf16.msra.mxu0 %v1536
        %1635 = vmatpush.bf16.msra.mxu0 %v1535
        %1636 = vmatpush.bf16.msra.mxu0 %v1534
        %1637 = vmatpush.bf16.msra.mxu0 %v1533
        %1638 = vmatpush.bf16.msra.mxu0 %v1532
        %1639 = vmatpush.bf16.msra.mxu0 %v1531
        %1640 = vmatpush.bf16.msra.mxu0 %v1530
        %1641 = vmatpush.bf16.msra.mxu0 %v1529
        %1642 = vmatmul.bf16.gmra.mxu0 %v1294
        %v1643 = vpop.f32.mrf.mxu0
        %v1644 = vadd.f32 %v1595, %v1643
        %v1645 = vpop.f32.mrf.mxu0
        %v1646 = vadd.f32 %v1597, %v1645
        %1647 = vmatmul.bf16.gmra.mxu0 %v1298
        %v1648 = vpop.f32.mrf.mxu0
        %v1649 = vadd.f32 %v1600, %v1648
        %v1650 = vpop.f32.mrf.mxu0
        %v1651 = vadd.f32 %v1602, %v1650
        %1652 = vmatmul.bf16.gmra.mxu0 %v1302
        %v1653 = vpop.f32.mrf.mxu0
        %v1654 = vadd.f32 %v1605, %v1653
        %v1655 = vpop.f32.mrf.mxu0
        %v1656 = vadd.f32 %v1607, %v1655
        %1657 = vmatmul.bf16.gmra.mxu0 %v1306
        %v1658 = vpop.f32.mrf.mxu0
        %v1659 = vadd.f32 %v1610, %v1658
        %v1660 = vpop.f32.mrf.mxu0
        %v1661 = vadd.f32 %v1612, %v1660
        %1662 = vmatmul.bf16.gmra.mxu0 %v1310
        %v1663 = vpop.f32.mrf.mxu0
        %v1664 = vadd.f32 %v1615, %v1663
        %v1665 = vpop.f32.mrf.mxu0
        %v1666 = vadd.f32 %v1617, %v1665
        %1667 = vmatmul.bf16.gmra.mxu0 %v1314
        %v1668 = vpop.f32.mrf.mxu0
        %v1669 = vadd.f32 %v1620, %v1668
        %v1670 = vpop.f32.mrf.mxu0
        %v1671 = vadd.f32 %v1622, %v1670
        %1672 = vmatmul.bf16.gmra.mxu0 %v1318
        %v1673 = vpop.f32.mrf.mxu0
        %v1674 = vadd.f32 %v1625, %v1673
        %v1675 = vpop.f32.mrf.mxu0
        %v1676 = vadd.f32 %v1627, %v1675
        %1677 = vmatmul.bf16.gmra.mxu0 %v1322
        %v1678 = vpop.f32.mrf.mxu0
        %v1679 = vadd.f32 %v1630, %v1678
        %v1680 = vpop.f32.mrf.mxu0
        %v1681 = vadd.f32 %v1632, %v1680
        %1682 = vdwg.mxu0
        %1683 = vmatpush.bf16.msra.mxu0 %v1544
        %1684 = vmatpush.bf16.msra.mxu0 %v1543
        %1685 = vmatpush.bf16.msra.mxu0 %v1542
        %1686 = vmatpush.bf16.msra.mxu0 %v1541
        %1687 = vmatpush.bf16.msra.mxu0 %v1540
        %1688 = vmatpush.bf16.msra.mxu0 %v1539
        %1689 = vmatpush.bf16.msra.mxu0 %v1538
        %1690 = vmatpush.bf16.msra.mxu0 %v1537
        %1691 = vmatmul.bf16.gmra.mxu0 %v1295
        %v1692 = vpop.f32.mrf.mxu0
        %v1693 = vadd.f32 %v1644, %v1692
        %v1694 = vpop.f32.mrf.mxu0
        %v1695 = vadd.f32 %v1646, %v1694
        %1696 = vmatmul.bf16.gmra.mxu0 %v1299
        %v1697 = vpop.f32.mrf.mxu0
        %v1698 = vadd.f32 %v1649, %v1697
        %v1699 = vpop.f32.mrf.mxu0
        %v1700 = vadd.f32 %v1651, %v1699
        %1701 = vmatmul.bf16.gmra.mxu0 %v1303
        %v1702 = vpop.f32.mrf.mxu0
        %v1703 = vadd.f32 %v1654, %v1702
        %v1704 = vpop.f32.mrf.mxu0
        %v1705 = vadd.f32 %v1656, %v1704
        %1706 = vmatmul.bf16.gmra.mxu0 %v1307
        %v1707 = vpop.f32.mrf.mxu0
        %v1708 = vadd.f32 %v1659, %v1707
        %v1709 = vpop.f32.mrf.mxu0
        %v1710 = vadd.f32 %v1661, %v1709
        %1711 = vmatmul.bf16.gmra.mxu0 %v1311
        %v1712 = vpop.f32.mrf.mxu0
        %v1713 = vadd.f32 %v1664, %v1712
        %v1714 = vpop.f32.mrf.mxu0
        %v1715 = vadd.f32 %v1666, %v1714
        %1716 = vmatmul.bf16.gmra.mxu0 %v1315
        %v1717 = vpop.f32.mrf.mxu0
        %v1718 = vadd.f32 %v1669, %v1717
        %v1719 = vpop.f32.mrf.mxu0
        %v1720 = vadd.f32 %v1671, %v1719
        %1721 = vmatmul.bf16.gmra.mxu0 %v1319
        %v1722 = vpop.f32.mrf.mxu0
        %v1723 = vadd.f32 %v1674, %v1722
        %v1724 = vpop.f32.mrf.mxu0
        %v1725 = vadd.f32 %v1676, %v1724
        %1726 = vmatmul.bf16.gmra.mxu0 %v1323
        %v1727 = vpop.f32.mrf.mxu0
        %v1728 = vadd.f32 %v1679, %v1727
        %v1729 = vpop.f32.mrf.mxu0
        %v1730 = vadd.f32 %v1681, %v1729
        %1731 = vdwg.mxu0
        %1732 = vmatpush.bf16.msra.mxu0 %v1552
        %1733 = vmatpush.bf16.msra.mxu0 %v1551
        %1734 = vmatpush.bf16.msra.mxu0 %v1550
        %1735 = vmatpush.bf16.msra.mxu0 %v1549
        %1736 = vmatpush.bf16.msra.mxu0 %v1548
        %1737 = vmatpush.bf16.msra.mxu0 %v1547
        %1738 = vmatpush.bf16.msra.mxu0 %v1546
        %1739 = vmatpush.bf16.msra.mxu0 %v1545
        %1740 = vmatmul.bf16.gmra.mxu0 %v1296
        %v1741 = vpop.f32.mrf.mxu0
        %v1742 = vadd.f32 %v1693, %v1741
        %v1743 = vpop.f32.mrf.mxu0
        %v1744 = vadd.f32 %v1695, %v1743
        %1745 = vmatmul.bf16.gmra.mxu0 %v1300
        %v1746 = vpop.f32.mrf.mxu0
        %v1747 = vadd.f32 %v1698, %v1746
        %v1748 = vpop.f32.mrf.mxu0
        %v1749 = vadd.f32 %v1700, %v1748
        %1750 = vmatmul.bf16.gmra.mxu0 %v1304
        %v1751 = vpop.f32.mrf.mxu0
        %v1752 = vadd.f32 %v1703, %v1751
        %v1753 = vpop.f32.mrf.mxu0
        %v1754 = vadd.f32 %v1705, %v1753
        %1755 = vmatmul.bf16.gmra.mxu0 %v1308
        %v1756 = vpop.f32.mrf.mxu0
        %v1757 = vadd.f32 %v1708, %v1756
        %v1758 = vpop.f32.mrf.mxu0
        %v1759 = vadd.f32 %v1710, %v1758
        %1760 = vmatmul.bf16.gmra.mxu0 %v1312
        %v1761 = vpop.f32.mrf.mxu0
        %v1762 = vadd.f32 %v1713, %v1761
        %v1763 = vpop.f32.mrf.mxu0
        %v1764 = vadd.f32 %v1715, %v1763
        %1765 = vmatmul.bf16.gmra.mxu0 %v1316
        %v1766 = vpop.f32.mrf.mxu0
        %v1767 = vadd.f32 %v1718, %v1766
        %v1768 = vpop.f32.mrf.mxu0
        %v1769 = vadd.f32 %v1720, %v1768
        %1770 = vmatmul.bf16.gmra.mxu0 %v1320
        %v1771 = vpop.f32.mrf.mxu0
        %v1772 = vadd.f32 %v1723, %v1771
        %v1773 = vpop.f32.mrf.mxu0
        %v1774 = vadd.f32 %v1725, %v1773
        %1775 = vmatmul.bf16.gmra.mxu0 %v1324
        %v1776 = vpop.f32.mrf.mxu0
        %v1777 = vadd.f32 %v1728, %v1776
        %v1778 = vpop.f32.mrf.mxu0
        %v1779 = vadd.f32 %v1730, %v1778
        %1780 = vdwg.mxu0
        %v1781 = vadd.f32 %v1742, %v295
        %v1782 = vadd.f32 %v1744, %v296
        %v1783 = vadd.f32 %v1747, %v297
        %v1784 = vadd.f32 %v1749, %v298
        %v1785 = vadd.f32 %v1752, %v299
        %v1786 = vadd.f32 %v1754, %v300
        %v1787 = vadd.f32 %v1757, %v301
        %v1788 = vadd.f32 %v1759, %v302
        %v1789 = vadd.f32 %v1762, %v303
        %v1790 = vadd.f32 %v1764, %v304
        %v1791 = vadd.f32 %v1767, %v305
        %v1792 = vadd.f32 %v1769, %v306
        %v1793 = vadd.f32 %v1772, %v307
        %v1794 = vadd.f32 %v1774, %v308
        %v1795 = vadd.f32 %v1777, %v309
        %v1796 = vadd.f32 %v1779, %v310
        %1797 = vst [vmem:[%s292] sm:$0xff] %v1781
        %1798 = vst [vmem:[%s292 + $0x8] sm:$0xff] %v1782
        %1799 = vst [vmem:[%s292 + $0x10] sm:$0xff] %v1783
        %1800 = vst [vmem:[%s292 + $0x18] sm:$0xff] %v1784
        %1801 = vst [vmem:[%s292 + $0x20] sm:$0xff] %v1785
        %1802 = vst [vmem:[%s292 + $0x28] sm:$0xff] %v1786
        %1803 = vst [vmem:[%s292 + $0x30] sm:$0xff] %v1787
        %1804 = vst [vmem:[%s292 + $0x38] sm:$0xff] %v1788
        %1805 = vst [vmem:[%s292 + $0x40] sm:$0xff] %v1789
        %1806 = vst [vmem:[%s292 + $0x48] sm:$0xff] %v1790
        %1807 = vst [vmem:[%s292 + $0x50] sm:$0xff] %v1791
        %1808 = vst [vmem:[%s292 + $0x58] sm:$0xff] %v1792
        %1809 = vst [vmem:[%s292 + $0x60] sm:$0xff] %v1793
        %1810 = vst [vmem:[%s292 + $0x68] sm:$0xff] %v1794
        %1811 = vst [vmem:[%s292 + $0x70] sm:$0xff] %v1795
        %1812 = vst [vmem:[%s292 + $0x78] sm:$0xff] %v1796
        %s1813 = sand.u32 %s142, 1
        %s1814 = scalar_lea.sflag [#allocation4], %s1813
        %s1815 = sand.u32 %s142, 1
        %s1816 = smul.addr %s1815, 128
        %s1817 = scalar_lea.vmem [#allocation10], %s1816
        // Predicated region
        $region57: #{residual_add_mlp.1} parent=39 // pred_check
          %p1818 = pneg %p152
        $region58: #{residual_add_mlp.1} parent=39 // pred_check_branch
          %1820 = sbr.rel (%p1818) target = $region60
        $region59: #{residual_add_mlp.1} parent=39 // pred_region
          %s1821 = smul.u32 16, %s24
          %1823 = vsyncadd %s1814, 0
          %s1824 = smul.addr %s1821, 8
          %s1825 = scalar_lea.hbm %s5, %s1824
          %s1826 = sshll.u32 %s1817, 4
          %s1827 = int_to_ptr.vmem [resolvable:$true] %s1826
          %s1828 = sshll.u32 %s1825, 4
          %s1829 = int_to_ptr.hbm [resolvable:$true] %s1828
          %1834 = dma.vmem_to_hbm [thread:$0]  %s1827, 2048, %s1829, %s1814, 128, 128, 8
        $region60: #{residual_add_mlp.1} parent=39 // pred_fallthru
          _
      $region40: #{residual_add_mlp.1} parent=5 // pred_fallthru
        _
      %p1835 = scmp.le.s32.totalorder 2, %s19
      // Predicated region
      $region61: #{residual_add_mlp.1} parent=5 // pred_check
        %p1836 = pneg %p1835
      $region62: #{residual_add_mlp.1} parent=5 // pred_check_branch
        %1838 = sbr.rel (%p1836) target = $region64
      $region63: #{residual_add_mlp.1} parent=5 // pred_region
        %s1839 = ssub.s32 %s19, 2
        // Predicated region
        $region65: #{residual_add_mlp.1} parent=63 // pred_check
          %p1840 = pneg %p158
        $region66: #{residual_add_mlp.1} parent=63 // pred_check_branch
          %1842 = sbr.rel (%p1840) target = $region68
        $region67: #{residual_add_mlp.1} parent=63 // pred_region
          %s1843 = sand.u32 %s143, 1
          %s1844 = scalar_lea.sflag [#allocation4], %s1843
          %s1845 = sand.u32 %s143, 1
          %s1846 = smul.addr %s1845, 128
          %s1847 = scalar_lea.vmem [#allocation10], %s1846
          %1849 = dma.done %s1844, 2048
        $region68: #{residual_add_mlp.1} parent=63 // pred_fallthru
          _
      $region64: #{residual_add_mlp.1} parent=5 // pred_fallthru
        _
    $region6: #{residual_add_mlp.1} parent=1 // loop_footer
      %s23 = sadd.s32 1, %s19
    $region7: #{residual_add_mlp.1} parent=1 // loop_footer_branch
      %18 = sbr.rel target = $region3
    $region8: #{residual_add_mlp.1} parent=1 // loop_exit
      _
    %1850 = vsyncpa [#allocation3], 1
    %s1851 = scalar_lea.sflag [#allocation3], 1
    %1852 = vsyncpa %s1851, 1
    %1853 = vsyncpa [#allocation6], 1
    %1854 = vsyncpa [#allocation9], 1
    %1855 = vsyncpa [#allocation4], 1
    %s1856 = scalar_lea.sflag [#allocation4], 1
    %1857 = vsyncpa %s1856, 1

</llo_original>
